<compile_context>
chip_gen: v5e
topology: v5e:2x2
jax: 0.10.0
libtpu: 0.0.40
codegen_flags: <defaults>
</compile_context>

<pallas_src>
import jax
import jax.numpy as jnp
from jax.experimental import pallas as pl
from jax.experimental.pallas import tpu as pltpu

SIGMA_DATA = 16.0
EPS = 1e-5  # PyTorch LayerNorm default eps

# ---------------------------------------------------------------------------
# Model dims (from the PyTorch module) and lane-padded versions.
# ---------------------------------------------------------------------------
C_ACT = 768
PAIR_CHANNEL = 128
SEQ_CHANNEL = 384
C_PAIR_COND_INITIAL = 267          # 128 pair + 139 relative-encoding features
C_SINGLE_COND_INITIAL = 831        # 384 single + 447 target features
C_NOISE_EMBEDDING = 256
TRANSITION_FACTOR = 2              # AF3 diffusion transition expansion factor

REL_CH = C_PAIR_COND_INITIAL - PAIR_CHANNEL          # 139
REL_PAD = 256                                        # 139 -> 256 (lane multiple)
TGT_CH = C_SINGLE_COND_INITIAL - SEQ_CHANNEL         # 447
TGT_PAD = 512                                        # 447 -> 512 (lane multiple)
C_PAIR_PAD = PAIR_CHANNEL + REL_PAD                  # 384
C_SINGLE_PAD = SEQ_CHANNEL + TGT_PAD                 # 896

VMEM_LIMIT = 32 * 1024 * 1024       # safe on v5e/v6e/v7x; tiles use only a few MB


# ---------------------------------------------------------------------------
# Small helpers
# ---------------------------------------------------------------------------
def _round_up(x, m):
    return -(-x // m) * m


def _row_block(n, target):
    """Pick a sublane-aligned row tile and the padded row count."""
    block = min(target, _round_up(n, 8))
    return block, _round_up(n, block)


def _pad_rows(x, n_pad):
    return x if x.shape[0] == n_pad else jnp.pad(x, ((0, n_pad - x.shape[0]), (0, 0)))


def _pad_cols(x, c_pad):
    return x if x.shape[-1] == c_pad else jnp.pad(x, ((0, 0), (0, c_pad - x.shape[-1])))


# ---------------------------------------------------------------------------
# In-kernel math helpers (traced inside pallas kernels)
# ---------------------------------------------------------------------------
def _ln(x, gamma):
    """LayerNorm(no bias) over the full lane axis, f32 statistics."""
    x = x.astype(jnp.float32)
    mu = jnp.mean(x, axis=-1, keepdims=True)
    var = jnp.mean((x - mu) ** 2, axis=-1, keepdims=True)
    return (x - mu) * jax.lax.rsqrt(var + EPS) * gamma


def _masked_ln(x, gamma, n_real):
    """LayerNorm over the first `n_real` channels of a zero-padded lane axis.

    Pad columns are guaranteed zero, so sums already exclude them; the mask
    only removes the (-mu) contribution of pad columns from the variance and
    zeroes the normalized pad outputs.
    """
    x = x.astype(jnp.float32)
    col = jax.lax.broadcasted_iota(jnp.int32, (1, x.shape[-1]), 1)
    mask = (col < n_real).astype(jnp.float32)
    inv_n = 1.0 / float(n_real)
    mu = jnp.sum(x * mask, axis=-1, keepdims=True) * inv_n
    xc = (x - mu) * mask
    var = jnp.sum(xc * xc, axis=-1, keepdims=True) * inv_n
    return xc * jax.lax.rsqrt(var + EPS) * gamma


def _transition_body(x, gamma, w1_bf16, w2_bf16):
    """DiffusionTransition: LN -> Linear(4c) -> SwiGLU -> Linear(c).
    Residual add is done by the caller (matches `x += transition(x)`)."""
    xn = _ln(x, gamma).astype(jnp.bfloat16)
    h = jnp.dot(xn, w1_bf16, preferred_element_type=jnp.float32)
    nh = h.shape[-1] // 2
    gated = (jax.nn.silu(h[:, :nh]) * h[:, nh:]).astype(jnp.bfloat16)
    return jnp.dot(gated, w2_bf16, preferred_element_type=jnp.float32)


# ---------------------------------------------------------------------------
# Fused pair-conditioning kernel (dominant cost: T*T rows)
#   concat(pair, rel) -> LN -> proj -> +transition0 -> +transition1
# ---------------------------------------------------------------------------
def _pair_cond_kernel(pair_ref, rel_ref, g_init_ref, w_init_ref,
                      g0_ref, w01_ref, w02_ref,
                      g1_ref, w11_ref, w12_ref, o_ref):
    x = jnp.concatenate([pair_ref[...], rel_ref[...]], axis=-1)   # (rows, 384)
    xn = _masked_ln(x, g_init_ref[...], C_PAIR_COND_INITIAL).astype(jnp.bfloat16)
    h = jnp.dot(xn, w_init_ref[...], preferred_element_type=jnp.float32)
    h = h + _transition_body(h, g0_ref[...], w01_ref[...], w02_ref[...])
    h = h + _transition_body(h, g1_ref[...], w11_ref[...], w12_ref[...])
    o_ref[...] = h


def pair_conditioning(pair2d, rel2d, params, block_target=512):
    n = pair2d.shape[0]
    block, n_pad = _row_block(n, block_target)
    pair2d = _pad_rows(pair2d, n_pad)
    rel2d = _pad_rows(rel2d, n_pad)
    g0, w01, w02 = params['pair_trans0']
    g1, w11, w12 = params['pair_trans1']

    w_bytes = 2 * (params['pair_init_w'].size + w01.size + w02.size
                   + w11.size + w12.size)                       # bf16 weights
    mm_flops = 2 * n_pad * (C_PAIR_PAD * PAIR_CHANNEL
                            + 2 * (PAIR_CHANNEL * w01.shape[1]
                                   + w02.shape[0] * PAIR_CHANNEL))
    cost = pl.CostEstimate(
        flops=int(mm_flops),
        transcendentals=int(n_pad * 2 * w02.shape[0]),          # silu exps
        bytes_accessed=int(4 * n_pad * (PAIR_CHANNEL + REL_PAD + PAIR_CHANNEL)
                           + w_bytes))

    out = pl.pallas_call(
        _pair_cond_kernel,
        out_shape=jax.ShapeDtypeStruct((n_pad, PAIR_CHANNEL), jnp.float32),
        grid=(n_pad // block,),
        in_specs=[
            pl.BlockSpec((block, PAIR_CHANNEL), lambda i: (i, 0)),
            pl.BlockSpec((block, REL_PAD), lambda i: (i, 0)),
            pl.BlockSpec((1, C_PAIR_PAD), lambda i: (0, 0)),
            pl.BlockSpec((C_PAIR_PAD, PAIR_CHANNEL), lambda i: (0, 0)),
            pl.BlockSpec((1, PAIR_CHANNEL), lambda i: (0, 0)),
            pl.BlockSpec(w01.shape, lambda i: (0, 0)),
            pl.BlockSpec(w02.shape, lambda i: (0, 0)),
            pl.BlockSpec((1, PAIR_CHANNEL), lambda i: (0, 0)),
            pl.BlockSpec(w11.shape, lambda i: (0, 0)),
            pl.BlockSpec(w12.shape, lambda i: (0, 0)),
        ],
        out_specs=pl.BlockSpec((block, PAIR_CHANNEL), lambda i: (i, 0)),
        compiler_params=pltpu.CompilerParams(
            dimension_semantics=("parallel",), vmem_limit_bytes=VMEM_LIMIT),
        cost_estimate=cost,
    )(pair2d, rel2d, params['pair_init_g'], params['pair_init_w'],
      g0, w01, w02, g1, w11, w12)
    return out[:n]


# ---------------------------------------------------------------------------
# Fused single-conditioning kernel
#   concat(single, target) -> LN -> proj -> +noise_emb -> +trans0 -> +trans1
#   plus single_cond_embedding LN -> proj (second, lane-dense 768ch output)
# ---------------------------------------------------------------------------
def _single_cond_kernel(se_ref, tf_ref, ne_ref, g_init_ref, w_init_ref,
                        g0_ref, w01_ref, w02_ref,
                        g1_ref, w11_ref, w12_ref,
                        gce_ref, wce_ref, sc_ref, ce_ref):
    x = jnp.concatenate([se_ref[...], tf_ref[...]], axis=-1)      # (rows, 896)
    xn = _masked_ln(x, g_init_ref[...], C_SINGLE_COND_INITIAL).astype(jnp.bfloat16)
    sc = jnp.dot(xn, w_init_ref[...], preferred_element_type=jnp.float32)
    sc = sc + ne_ref[...]                                         # (1, 384) bcast
    sc = sc + _transition_body(sc, g0_ref[...], w01_ref[...], w02_ref[...])
    sc = sc + _transition_body(sc, g1_ref[...], w11_ref[...], w12_ref[...])
    sc_ref[...] = sc
    cen = _ln(sc, gce_ref[...]).astype(jnp.bfloat16)
    ce_ref[...] = jnp.dot(cen, wce_ref[...], preferred_element_type=jnp.float32)


def single_conditioning(single_emb, target_pad, noise_emb, params, block_target=256):
    n = single_emb.shape[0]
    block, n_pad = _row_block(n, block_target)
    se = _pad_rows(single_emb, n_pad)
    tf = _pad_rows(target_pad, n_pad)
    g0, w01, w02 = params['single_trans0']
    g1, w11, w12 = params['single_trans1']

    sc, ce = pl.pallas_call(
        _single_cond_kernel,
        out_shape=(jax.ShapeDtypeStruct((n_pad, SEQ_CHANNEL), jnp.float32),
                   jax.ShapeDtypeStruct((n_pad, C_ACT), jnp.float32)),
        grid=(n_pad // block,),
        in_specs=[
            pl.BlockSpec((block, SEQ_CHANNEL), lambda i: (i, 0)),
            pl.BlockSpec((block, TGT_PAD), lambda i: (i, 0)),
            pl.BlockSpec((1, SEQ_CHANNEL), lambda i: (0, 0)),
            pl.BlockSpec((1, C_SINGLE_PAD), lambda i: (0, 0)),
            pl.BlockSpec((C_SINGLE_PAD, SEQ_CHANNEL), lambda i: (0, 0)),
            pl.BlockSpec((1, SEQ_CHANNEL), lambda i: (0, 0)),
            pl.BlockSpec(w01.shape, lambda i: (0, 0)),
            pl.BlockSpec(w02.shape, lambda i: (0, 0)),
            pl.BlockSpec((1, SEQ_CHANNEL), lambda i: (0, 0)),
            pl.BlockSpec(w11.shape, lambda i: (0, 0)),
            pl.BlockSpec(w12.shape, lambda i: (0, 0)),
            pl.BlockSpec((1, SEQ_CHANNEL), lambda i: (0, 0)),
            pl.BlockSpec((SEQ_CHANNEL, C_ACT), lambda i: (0, 0)),
        ],
        out_specs=(pl.BlockSpec((block, SEQ_CHANNEL), lambda i: (i, 0)),
                   pl.BlockSpec((block, C_ACT), lambda i: (i, 0))),
        compiler_params=pltpu.CompilerParams(
            dimension_semantics=("parallel",), vmem_limit_bytes=VMEM_LIMIT),
    )(se, tf, noise_emb, params['single_init_g'], params['single_init_w'],
      g0, w01, w02, g1, w11, w12, params['cond_emb_g'], params['cond_emb_w'])
    return sc[:n], ce[:n]


# ---------------------------------------------------------------------------
# Noise embedding: cos(2*pi*(c*w+b)) -> LN -> Linear   (single tiny call)
# ---------------------------------------------------------------------------
def _noise_embed_kernel(c_ref, fw_ref, fb_ref, g_ref, w_ref, o_ref):
    c = c_ref[0, 0]
    emb = jnp.cos(2.0 * jnp.pi * (c * fw_ref[...] + fb_ref[...]))   # (1, 256)
    xn = _ln(emb, g_ref[...]).astype(jnp.bfloat16)
    o_ref[...] = jnp.dot(xn, w_ref[...], preferred_element_type=jnp.float32)


def noise_embedding(c_scalar, fw, fb, gamma, w):
    c_out = w.shape[1]
    return pl.pallas_call(
        _noise_embed_kernel,
        out_shape=jax.ShapeDtypeStruct((1, c_out), jnp.float32),
        in_specs=[pl.BlockSpec(memory_space=pltpu.MemorySpace.SMEM),
                  pl.BlockSpec(memory_space=pltpu.MemorySpace.VMEM),
                  pl.BlockSpec(memory_space=pltpu.MemorySpace.VMEM),
                  pl.BlockSpec(memory_space=pltpu.MemorySpace.VMEM),
                  pl.BlockSpec(memory_space=pltpu.MemorySpace.VMEM)],
        out_specs=pl.BlockSpec(memory_space=pltpu.MemorySpace.VMEM),
    )(c_scalar, fw, fb, gamma, w)


# ---------------------------------------------------------------------------
# output_norm: row-tiled LayerNorm over (T, 768)
# ---------------------------------------------------------------------------
def _layernorm_kernel(x_ref, g_ref, o_ref):
    o_ref[...] = _ln(x_ref[...], g_ref[...])


def layernorm(x, gamma, block_target=256):
    n, c = x.shape
    block, n_pad = _row_block(n, block_target)
    xp = _pad_rows(x, n_pad)
    out = pl.pallas_call(
        _layernorm_kernel,
        out_shape=jax.ShapeDtypeStruct((n_pad, c), jnp.float32),
        grid=(n_pad // block,),
        in_specs=[pl.BlockSpec((block, c), lambda i: (i, 0)),
                  pl.BlockSpec((1, c), lambda i: (0, 0))],
        out_specs=pl.BlockSpec((block, c), lambda i: (i, 0)),
        compiler_params=pltpu.CompilerParams(
            dimension_semantics=("parallel",), vmem_limit_bytes=VMEM_LIMIT),
    )(xp, gamma)
    return out[:n]


# ---------------------------------------------------------------------------
# Parameters (deterministic, synthetic).  Matmul weights stored bf16 (f32
# accumulation in-kernel); LayerNorm gammas f32.  Ragged input-channel dims
# are zero-padded to lane multiples.
# ---------------------------------------------------------------------------
def init_params(key):
    def w(k, fi, fo):
        return (jax.random.normal(k, (fi, fo), jnp.float32)
                / jnp.sqrt(jnp.float32(fi)))

    def pad_w_bf16(x, rows):           # zero-pad input-channel rows, cast bf16
        return jnp.pad(x, ((0, rows - x.shape[0]), (0, 0))).astype(jnp.bfloat16)

    def pad_g(c_real, c_pad):          # gamma = 1 on real channels, 0 on pads
        return jnp.pad(jnp.ones((1, c_real), jnp.float32),
                       ((0, 0), (0, c_pad - c_real)))

    keys = iter(jax.random.split(key, 32))

    def trans_params(c):
        h = TRANSITION_FACTOR * c
        return (jnp.ones((1, c), jnp.float32),
                w(next(keys), c, 2 * h).astype(jnp.bfloat16),
                w(next(keys), h, c).astype(jnp.bfloat16))

    return dict(
        pair_init_g=pad_g(C_PAIR_COND_INITIAL, C_PAIR_PAD),
        pair_init_w=pad_w_bf16(w(next(keys), C_PAIR_COND_INITIAL, PAIR_CHANNEL),
                               C_PAIR_PAD),
        pair_trans0=trans_params(PAIR_CHANNEL),
        pair_trans1=trans_params(PAIR_CHANNEL),
        single_init_g=pad_g(C_SINGLE_COND_INITIAL, C_SINGLE_PAD),
        single_init_w=pad_w_bf16(w(next(keys), C_SINGLE_COND_INITIAL, SEQ_CHANNEL),
                                 C_SINGLE_PAD),
        fourier_w=jax.random.normal(next(keys), (1, C_NOISE_EMBEDDING), jnp.float32),
        fourier_b=jax.random.uniform(next(keys), (1, C_NOISE_EMBEDDING), jnp.float32),
        noise_g=jnp.ones((1, C_NOISE_EMBEDDING), jnp.float32),
        noise_w=w(next(keys), C_NOISE_EMBEDDING, SEQ_CHANNEL).astype(jnp.bfloat16),
        single_trans0=trans_params(SEQ_CHANNEL),
        single_trans1=trans_params(SEQ_CHANNEL),
        cond_emb_g=jnp.ones((1, SEQ_CHANNEL), jnp.float32),
        cond_emb_w=w(next(keys), SEQ_CHANNEL, C_ACT).astype(jnp.bfloat16),
        out_norm_g=jnp.ones((1, C_ACT), jnp.float32),
        # Placeholder encoder/decoder projections (see TODOs below).
        enc_w=w(next(keys), 3, C_ACT),
        dec_w=w(next(keys), C_ACT, 3),
    )


# ---------------------------------------------------------------------------
# Forward pass
# ---------------------------------------------------------------------------
def diffusion_head_forward(params, positions_noisy, noise_level,
                           single_emb, pair_emb, target_feat, rel_features,
                           atom_mask, use_conditioning=True):
    T, A, _ = positions_noisy.shape
    uc = jnp.float32(1.0 if use_conditioning else 0.0)
    single_embedding = uc * single_emb                        # (T, 384)
    pair_embedding = uc * pair_emb                            # (T, T, 128)

    # --- pair conditioning (one fused row-tiled kernel) ----------------------
    pair2d = pair_embedding.reshape(T * T, PAIR_CHANNEL)
    rel2d = _pad_cols(rel_features.reshape(T * T, REL_CH), REL_PAD)
    pair_cond = pair_conditioning(pair2d, rel2d, params)      # (T*T, 128)

    # --- single conditioning + cond embedding (one fused kernel) -------------
    c = (0.25 * jnp.log(noise_level / SIGMA_DATA)).reshape(1, 1).astype(jnp.float32)
    noise_emb = noise_embedding(c, params['fourier_w'], params['fourier_b'],
                                params['noise_g'], params['noise_w'])  # (1, 384)
    tf_pad = _pad_cols(target_feat, TGT_PAD)
    single_cond, cond_emb = single_conditioning(
        single_embedding, tf_pad, noise_emb, params)          # (T,384), (T,768)

    # --- atom activations (lane-sparse xyz elementwise; left to XLA) ---------
    scale = jax.lax.rsqrt(noise_level ** 2 + SIGMA_DATA ** 2)
    act_atoms = positions_noisy * atom_mask[..., None] * scale          # (T,A,3)

    # TODO(synk): AtomCrossAttEncoder definition not provided; placeholder =
    # per-token mean of atom acts projected to c_act (K=3 matmul stays in XLA).
    token_act = act_atoms.mean(axis=1) @ params['enc_w']                # (T, 768)
    token_act = token_act + cond_emb

    # TODO(synk): DiffusionTransformer definition not provided; identity here.
    token_act = layernorm(token_act, params['out_norm_g'])    # output_norm

    # TODO(synk): AtomCrossAttDecoder definition not provided; placeholder =
    # per-token linear 768->3 broadcast to that token's atoms (N=3, stays in XLA).
    upd = jnp.broadcast_to((token_act @ params['dec_w'])[:, None, :], (T, A, 3))

    denom = noise_level ** 2 + SIGMA_DATA ** 2
    skip_scaling = SIGMA_DATA ** 2 / denom
    out_scaling = noise_level * SIGMA_DATA * jax.lax.rsqrt(denom)
    out = (skip_scaling * positions_noisy + out_scaling * upd) * atom_mask[..., None]

    return out, single_cond, pair_cond.reshape(T, T, PAIR_CHANNEL)


# ---------------------------------------------------------------------------
if __name__ == "__main__":
    key = jax.random.PRNGKey(0)
    pkey, *ikeys = jax.random.split(key, 8)
    params = init_params(pkey)

    T, A = 8, 4  # tokens, atoms per token (small synthetic shapes)
    positions_noisy = jax.random.normal(ikeys[0], (T, A, 3), jnp.float32) * 5.0
    noise_level = jnp.float32(8.0)
    single_emb = jax.random.normal(ikeys[1], (T, SEQ_CHANNEL), jnp.float32)
    pair_emb = jax.random.normal(ikeys[2], (T, T, PAIR_CHANNEL), jnp.float32)
    target_feat = jax.random.normal(ikeys[3], (T, TGT_CH), jnp.float32)
    # TODO(synk): featurization.create_relative_encoding not provided; use a
    # deterministic stand-in with the implied 267-128=139 feature channels.
    rel_features = jax.random.normal(ikeys[4], (T, T, REL_CH), jnp.float32)
    atom_mask = (jax.random.uniform(ikeys[5], (T, A)) > 0.1).astype(jnp.float32)

    out, single_cond, pair_cond = diffusion_head_forward(
        params, positions_noisy, noise_level, single_emb, pair_emb,
        target_feat, rel_features, atom_mask, use_conditioning=True)
    jax.block_until_ready((out, single_cond, pair_cond))

    assert out.shape == (T, A, 3)
    assert single_cond.shape == (T, SEQ_CHANNEL)
    assert pair_cond.shape == (T, T, PAIR_CHANNEL)
    assert bool(jnp.all(jnp.isfinite(out)))
    assert bool(jnp.all(jnp.isfinite(single_cond)))
    assert bool(jnp.all(jnp.isfinite(pair_cond)))
    print("KERNEL_OK")
</pallas_src>

<mosaic_0001>
module attributes {stable_mosaic.version = 11 : i64} {
  func.func @_pair_cond_kernel(%arg0: i32, %arg1: memref<64x128xf32, #tpu.memory_space<vmem>>, %arg2: memref<64x256xf32, #tpu.memory_space<vmem>>, %arg3: memref<1x384xf32, #tpu.memory_space<vmem>>, %arg4: memref<384x128xbf16, #tpu.memory_space<vmem>>, %arg5: memref<1x128xf32, #tpu.memory_space<vmem>>, %arg6: memref<128x512xbf16, #tpu.memory_space<vmem>>, %arg7: memref<256x128xbf16, #tpu.memory_space<vmem>>, %arg8: memref<1x128xf32, #tpu.memory_space<vmem>>, %arg9: memref<128x512xbf16, #tpu.memory_space<vmem>>, %arg10: memref<256x128xbf16, #tpu.memory_space<vmem>>, %arg11: memref<64x128xf32, #tpu.memory_space<vmem>>) attributes {dimension_semantics = [#tpu.dimension_semantics<parallel>], iteration_bounds = array<i64: 1>, scalar_prefetch = 0 : i64, scratch_operands = 0 : i64, tpu.core_type = #tpu.core_type<tc>, window_params = [{transform_indices = @transform_0, window_bounds = array<i64: 64, 128>}, {transform_indices = @transform_1, window_bounds = array<i64: 64, 256>}, {pipeline_mode = #tpu.pipeline_mode<synchronous>, transform_indices = @transform_2, window_bounds = array<i64: 1, 384>}, {pipeline_mode = #tpu.pipeline_mode<synchronous>, transform_indices = @transform_3, window_bounds = array<i64: 384, 128>}, {pipeline_mode = #tpu.pipeline_mode<synchronous>, transform_indices = @transform_4, window_bounds = array<i64: 1, 128>}, {pipeline_mode = #tpu.pipeline_mode<synchronous>, transform_indices = @transform_5, window_bounds = array<i64: 128, 512>}, {pipeline_mode = #tpu.pipeline_mode<synchronous>, transform_indices = @transform_6, window_bounds = array<i64: 256, 128>}, {pipeline_mode = #tpu.pipeline_mode<synchronous>, transform_indices = @transform_7, window_bounds = array<i64: 1, 128>}, {pipeline_mode = #tpu.pipeline_mode<synchronous>, transform_indices = @transform_8, window_bounds = array<i64: 128, 512>}, {pipeline_mode = #tpu.pipeline_mode<synchronous>, transform_indices = @transform_9, window_bounds = array<i64: 256, 128>}, {transform_indices = @transform_10, window_bounds = array<i64: 64, 128>}]} {
    %c0 = arith.constant 0 : index
    %c0_0 = arith.constant 0 : index
    %0 = vector.load %arg1[%c0, %c0_0] : memref<64x128xf32, #tpu.memory_space<vmem>>, vector<64x128xf32>
    %c0_1 = arith.constant 0 : index
    %c0_2 = arith.constant 0 : index
    %1 = vector.load %arg2[%c0_1, %c0_2] : memref<64x256xf32, #tpu.memory_space<vmem>>, vector<64x256xf32>
    %2 = tpu.concatenate %0, %1 in 1 : vector<64x128xf32>, vector<64x256xf32> -> vector<64x384xf32>
    %c0_3 = arith.constant 0 : index
    %c0_4 = arith.constant 0 : index
    %3 = vector.load %arg3[%c0_3, %c0_4] : memref<1x384xf32, #tpu.memory_space<vmem>>, vector<1x384xf32>
    %4 = tpu.iota {dimensions = array<i32: 1>} : vector<1x384xi32>
    %c267_i32 = arith.constant 267 : i32
    %5 = vector.broadcast %c267_i32 : i32 to vector<1x384xi32>
    %6 = arith.cmpi slt, %4, %5 : vector<1x384xi32>
    %7 = arith.extui %6 : vector<1x384xi1> to vector<1x384xi32>
    %8 = arith.sitofp %7 : vector<1x384xi32> to vector<1x384xf32>
    %9 = vector.broadcast %8 : vector<1x384xf32> to vector<64x384xf32>
    %10 = arith.mulf %2, %9 : vector<64x384xf32>
    %cst = arith.constant dense<0.000000e+00> : vector<64xf32>
    %11 = vector.multi_reduction <add>, %10, %cst [1] : vector<64x384xf32> to vector<64xf32>
    %12 = vector.shape_cast %11 : vector<64xf32> to vector<64x1xf32>
    %cst_5 = arith.constant 0.00374531839 : f32
    %13 = vector.broadcast %cst_5 : f32 to vector<64x1xf32>
    %14 = arith.mulf %12, %13 : vector<64x1xf32>
    %15 = vector.broadcast %14 : vector<64x1xf32> to vector<64x384xf32>
    %16 = arith.subf %2, %15 : vector<64x384xf32>
    %17 = vector.broadcast %8 : vector<1x384xf32> to vector<64x384xf32>
    %18 = arith.mulf %16, %17 : vector<64x384xf32>
    %19 = arith.mulf %18, %18 : vector<64x384xf32>
    %cst_6 = arith.constant dense<0.000000e+00> : vector<64xf32>
    %20 = vector.multi_reduction <add>, %19, %cst_6 [1] : vector<64x384xf32> to vector<64xf32>
    %21 = vector.shape_cast %20 : vector<64xf32> to vector<64x1xf32>
    %cst_7 = arith.constant 0.00374531839 : f32
    %22 = vector.broadcast %cst_7 : f32 to vector<64x1xf32>
    %23 = arith.mulf %21, %22 : vector<64x1xf32>
    %cst_8 = arith.constant 9.99999974E-6 : f32
    %24 = vector.broadcast %cst_8 : f32 to vector<64x1xf32>
    %25 = arith.addf %23, %24 : vector<64x1xf32>
    %26 = math.rsqrt %25 : vector<64x1xf32>
    %27 = vector.broadcast %26 : vector<64x1xf32> to vector<64x384xf32>
    %28 = arith.mulf %18, %27 : vector<64x384xf32>
    %29 = vector.broadcast %3 : vector<1x384xf32> to vector<64x384xf32>
    %30 = arith.mulf %28, %29 : vector<64x384xf32>
    %31 = arith.truncf %30 : vector<64x384xf32> to vector<64x384xbf16>
    %c0_9 = arith.constant 0 : index
    %c0_10 = arith.constant 0 : index
    %32 = vector.load %arg4[%c0_9, %c0_10] : memref<384x128xbf16, #tpu.memory_space<vmem>>, vector<384x128xbf16>
    %cst_11 = arith.constant dense<0.000000e+00> : vector<64x128xf32>
    %33 = tpu.matmul %31, %32, %cst_11 {dimension_numbers = #tpu.dot_dimension_numbers<[1], [0], [0], [1], [0, 0, 1, 1], [], []>} : vector<64x384xbf16>, vector<384x128xbf16>, vector<64x128xf32> -> vector<64x128xf32>
    %c0_12 = arith.constant 0 : index
    %c0_13 = arith.constant 0 : index
    %34 = vector.load %arg5[%c0_12, %c0_13] : memref<1x128xf32, #tpu.memory_space<vmem>>, vector<1x128xf32>
    %c0_14 = arith.constant 0 : index
    %c0_15 = arith.constant 0 : index
    %35 = vector.load %arg6[%c0_14, %c0_15] : memref<128x512xbf16, #tpu.memory_space<vmem>>, vector<128x512xbf16>
    %c0_16 = arith.constant 0 : index
    %c0_17 = arith.constant 0 : index
    %36 = vector.load %arg7[%c0_16, %c0_17] : memref<256x128xbf16, #tpu.memory_space<vmem>>, vector<256x128xbf16>
    %cst_18 = arith.constant dense<0.000000e+00> : vector<64xf32>
    %37 = vector.multi_reduction <add>, %33, %cst_18 [1] : vector<64x128xf32> to vector<64xf32>
    %38 = vector.shape_cast %37 : vector<64xf32> to vector<64x1xf32>
    %cst_19 = arith.constant 1.280000e+02 : f32
    %39 = vector.broadcast %cst_19 : f32 to vector<64x1xf32>
    %40 = arith.divf %38, %39 : vector<64x1xf32>
    %41 = vector.broadcast %40 : vector<64x1xf32> to vector<64x128xf32>
    %42 = arith.subf %33, %41 : vector<64x128xf32>
    %43 = arith.mulf %42, %42 : vector<64x128xf32>
    %cst_20 = arith.constant dense<0.000000e+00> : vector<64xf32>
    %44 = vector.multi_reduction <add>, %43, %cst_20 [1] : vector<64x128xf32> to vector<64xf32>
    %45 = vector.shape_cast %44 : vector<64xf32> to vector<64x1xf32>
    %cst_21 = arith.constant 1.280000e+02 : f32
    %46 = vector.broadcast %cst_21 : f32 to vector<64x1xf32>
    %47 = arith.divf %45, %46 : vector<64x1xf32>
    %48 = vector.broadcast %40 : vector<64x1xf32> to vector<64x128xf32>
    %49 = arith.subf %33, %48 : vector<64x128xf32>
    %cst_22 = arith.constant 9.99999974E-6 : f32
    %50 = vector.broadcast %cst_22 : f32 to vector<64x1xf32>
    %51 = arith.addf %47, %50 : vector<64x1xf32>
    %52 = math.rsqrt %51 : vector<64x1xf32>
    %53 = vector.broadcast %52 : vector<64x1xf32> to vector<64x128xf32>
    %54 = arith.mulf %49, %53 : vector<64x128xf32>
    %55 = vector.broadcast %34 : vector<1x128xf32> to vector<64x128xf32>
    %56 = arith.mulf %54, %55 : vector<64x128xf32>
    %57 = arith.truncf %56 : vector<64x128xf32> to vector<64x128xbf16>
    %cst_23 = arith.constant dense<0.000000e+00> : vector<64x512xf32>
    %58 = tpu.matmul %57, %35, %cst_23 {dimension_numbers = #tpu.dot_dimension_numbers<[1], [0], [0], [1], [0, 0, 1, 1], [], []>} : vector<64x128xbf16>, vector<128x512xbf16>, vector<64x512xf32> -> vector<64x512xf32>
    %59 = vector.extract_strided_slice %58 {offsets = [0, 0], sizes = [64, 256], strides = [1, 1]} : vector<64x512xf32> to vector<64x256xf32>
    %60 = arith.negf %59 : vector<64x256xf32>
    %61 = math.exp %60 : vector<64x256xf32>
    %cst_24 = arith.constant 1.000000e+00 : f32
    %62 = vector.broadcast %cst_24 : f32 to vector<64x256xf32>
    %63 = arith.addf %62, %61 : vector<64x256xf32>
    %64 = arith.divf %62, %63 : vector<64x256xf32>
    %65 = arith.mulf %59, %64 : vector<64x256xf32>
    %66 = vector.extract_strided_slice %58 {offsets = [0, 256], sizes = [64, 256], strides = [1, 1]} : vector<64x512xf32> to vector<64x256xf32>
    %67 = arith.mulf %65, %66 : vector<64x256xf32>
    %68 = arith.truncf %67 : vector<64x256xf32> to vector<64x256xbf16>
    %cst_25 = arith.constant dense<0.000000e+00> : vector<64x128xf32>
    %69 = tpu.matmul %68, %36, %cst_25 {dimension_numbers = #tpu.dot_dimension_numbers<[1], [0], [0], [1], [0, 0, 1, 1], [], []>} : vector<64x256xbf16>, vector<256x128xbf16>, vector<64x128xf32> -> vector<64x128xf32>
    %70 = arith.addf %33, %69 : vector<64x128xf32>
    %c0_26 = arith.constant 0 : index
    %c0_27 = arith.constant 0 : index
    %71 = vector.load %arg8[%c0_26, %c0_27] : memref<1x128xf32, #tpu.memory_space<vmem>>, vector<1x128xf32>
    %c0_28 = arith.constant 0 : index
    %c0_29 = arith.constant 0 : index
    %72 = vector.load %arg9[%c0_28, %c0_29] : memref<128x512xbf16, #tpu.memory_space<vmem>>, vector<128x512xbf16>
    %c0_30 = arith.constant 0 : index
    %c0_31 = arith.constant 0 : index
    %73 = vector.load %arg10[%c0_30, %c0_31] : memref<256x128xbf16, #tpu.memory_space<vmem>>, vector<256x128xbf16>
    %cst_32 = arith.constant dense<0.000000e+00> : vector<64xf32>
    %74 = vector.multi_reduction <add>, %70, %cst_32 [1] : vector<64x128xf32> to vector<64xf32>
    %75 = vector.shape_cast %74 : vector<64xf32> to vector<64x1xf32>
    %cst_33 = arith.constant 1.280000e+02 : f32
    %76 = vector.broadcast %cst_33 : f32 to vector<64x1xf32>
    %77 = arith.divf %75, %76 : vector<64x1xf32>
    %78 = vector.broadcast %77 : vector<64x1xf32> to vector<64x128xf32>
    %79 = arith.subf %70, %78 : vector<64x128xf32>
    %80 = arith.mulf %79, %79 : vector<64x128xf32>
    %cst_34 = arith.constant dense<0.000000e+00> : vector<64xf32>
    %81 = vector.multi_reduction <add>, %80, %cst_34 [1] : vector<64x128xf32> to vector<64xf32>
    %82 = vector.shape_cast %81 : vector<64xf32> to vector<64x1xf32>
    %cst_35 = arith.constant 1.280000e+02 : f32
    %83 = vector.broadcast %cst_35 : f32 to vector<64x1xf32>
    %84 = arith.divf %82, %83 : vector<64x1xf32>
    %85 = vector.broadcast %77 : vector<64x1xf32> to vector<64x128xf32>
    %86 = arith.subf %70, %85 : vector<64x128xf32>
    %cst_36 = arith.constant 9.99999974E-6 : f32
    %87 = vector.broadcast %cst_36 : f32 to vector<64x1xf32>
    %88 = arith.addf %84, %87 : vector<64x1xf32>
    %89 = math.rsqrt %88 : vector<64x1xf32>
    %90 = vector.broadcast %89 : vector<64x1xf32> to vector<64x128xf32>
    %91 = arith.mulf %86, %90 : vector<64x128xf32>
    %92 = vector.broadcast %71 : vector<1x128xf32> to vector<64x128xf32>
    %93 = arith.mulf %91, %92 : vector<64x128xf32>
    %94 = arith.truncf %93 : vector<64x128xf32> to vector<64x128xbf16>
    %cst_37 = arith.constant dense<0.000000e+00> : vector<64x512xf32>
    %95 = tpu.matmul %94, %72, %cst_37 {dimension_numbers = #tpu.dot_dimension_numbers<[1], [0], [0], [1], [0, 0, 1, 1], [], []>} : vector<64x128xbf16>, vector<128x512xbf16>, vector<64x512xf32> -> vector<64x512xf32>
    %96 = vector.extract_strided_slice %95 {offsets = [0, 0], sizes = [64, 256], strides = [1, 1]} : vector<64x512xf32> to vector<64x256xf32>
    %97 = arith.negf %96 : vector<64x256xf32>
    %98 = math.exp %97 : vector<64x256xf32>
    %cst_38 = arith.constant 1.000000e+00 : f32
    %99 = vector.broadcast %cst_38 : f32 to vector<64x256xf32>
    %100 = arith.addf %99, %98 : vector<64x256xf32>
    %101 = arith.divf %99, %100 : vector<64x256xf32>
    %102 = arith.mulf %96, %101 : vector<64x256xf32>
    %103 = vector.extract_strided_slice %95 {offsets = [0, 256], sizes = [64, 256], strides = [1, 1]} : vector<64x512xf32> to vector<64x256xf32>
    %104 = arith.mulf %102, %103 : vector<64x256xf32>
    %105 = arith.truncf %104 : vector<64x256xf32> to vector<64x256xbf16>
    %cst_39 = arith.constant dense<0.000000e+00> : vector<64x128xf32>
    %106 = tpu.matmul %105, %73, %cst_39 {dimension_numbers = #tpu.dot_dimension_numbers<[1], [0], [0], [1], [0, 0, 1, 1], [], []>} : vector<64x256xbf16>, vector<256x128xbf16>, vector<64x128xf32> -> vector<64x128xf32>
    %107 = arith.addf %70, %106 : vector<64x128xf32>
    %c0_40 = arith.constant 0 : index
    %c0_41 = arith.constant 0 : index
    %108 = vector.load %arg11[%c0_40, %c0_41] : memref<64x128xf32, #tpu.memory_space<vmem>>, vector<64x128xf32>
    tpu.vector_store %arg11[%c0_40, %c0_41], %107 {strides = array<i32>} : memref<64x128xf32, #tpu.memory_space<vmem>>, vector<64x128xf32>,
    return
  }
  func.func @transform_0(%arg0: i32) -> (i32, i32) {
    %c0_i32 = arith.constant 0 : i32
    %c0_i32_0 = arith.constant 0 : i32
    return %arg0, %c0_i32 : i32, i32
  }
  func.func @transform_1(%arg0: i32) -> (i32, i32) {
    %c0_i32 = arith.constant 0 : i32
    %c0_i32_0 = arith.constant 0 : i32
    return %arg0, %c0_i32 : i32, i32
  }
  func.func @transform_2(%arg0: i32) -> (i32, i32) {
    %c0_i32 = arith.constant 0 : i32
    %c0_i32_0 = arith.constant 0 : i32
    %c0_i32_1 = arith.constant 0 : i32
    return %c0_i32, %c0_i32_0 : i32, i32
  }
  func.func @transform_3(%arg0: i32) -> (i32, i32) {
    %c0_i32 = arith.constant 0 : i32
    %c0_i32_0 = arith.constant 0 : i32
    %c0_i32_1 = arith.constant 0 : i32
    return %c0_i32, %c0_i32_0 : i32, i32
  }
  func.func @transform_4(%arg0: i32) -> (i32, i32) {
    %c0_i32 = arith.constant 0 : i32
    %c0_i32_0 = arith.constant 0 : i32
    %c0_i32_1 = arith.constant 0 : i32
    return %c0_i32, %c0_i32_0 : i32, i32
  }
  func.func @transform_5(%arg0: i32) -> (i32, i32) {
    %c0_i32 = arith.constant 0 : i32
    %c0_i32_0 = arith.constant 0 : i32
    %c0_i32_1 = arith.constant 0 : i32
    return %c0_i32, %c0_i32_0 : i32, i32
  }
  func.func @transform_6(%arg0: i32) -> (i32, i32) {
    %c0_i32 = arith.constant 0 : i32
    %c0_i32_0 = arith.constant 0 : i32
    %c0_i32_1 = arith.constant 0 : i32
    return %c0_i32, %c0_i32_0 : i32, i32
  }
  func.func @transform_7(%arg0: i32) -> (i32, i32) {
    %c0_i32 = arith.constant 0 : i32
    %c0_i32_0 = arith.constant 0 : i32
    %c0_i32_1 = arith.constant 0 : i32
    return %c0_i32, %c0_i32_0 : i32, i32
  }
  func.func @transform_8(%arg0: i32) -> (i32, i32) {
    %c0_i32 = arith.constant 0 : i32
    %c0_i32_0 = arith.constant 0 : i32
    %c0_i32_1 = arith.constant 0 : i32
    return %c0_i32, %c0_i32_0 : i32, i32
  }
  func.func @transform_9(%arg0: i32) -> (i32, i32) {
    %c0_i32 = arith.constant 0 : i32
    %c0_i32_0 = arith.constant 0 : i32
    %c0_i32_1 = arith.constant 0 : i32
    return %c0_i32, %c0_i32_0 : i32, i32
  }
  func.func @transform_10(%arg0: i32) -> (i32, i32) {
    %c0_i32 = arith.constant 0 : i32
    %c0_i32_0 = arith.constant 0 : i32
    return %arg0, %c0_i32 : i32, i32
  }
}

</mosaic_0001>

<llo_original>
// kernel: tpu_custom_call.1
$region0: #{tpu_custom_call.1}
  #allocation0 [shape = 'u32[]', space=smem, size = 0x4, offset = 0x4, fixed_abs, tag = 'smem constant byte address 0x4 - core index']
  #allocation1 [shape = 'u32[72,128]{1,0:T(1,128)}', space=vmem, size = 0x9000, scoped, tag = 'internal scratch']
  %s0 = inlined_call_operand.hbm [shape: f32[64,128], index: 0, kind: input, shape index: {}]
  %s1 = inlined_call_operand.hbm [shape: f32[64,256], index: 1, kind: input, shape index: {}]
  %s2 = inlined_call_operand.hbm [shape: f32[1,384], index: 2, kind: input, shape index: {}]
  %s3 = inlined_call_operand.hbm [shape: bf16[384,128], index: 3, kind: input, shape index: {}]
  %s4 = inlined_call_operand.vmem [shape: f32[1,128], index: 4, kind: input, shape index: {}]
  %s5 = inlined_call_operand.hbm [shape: bf16[128,512], index: 5, kind: input, shape index: {}]
  %s6 = inlined_call_operand.hbm [shape: bf16[256,128], index: 6, kind: input, shape index: {}]
  %s7 = inlined_call_operand.vmem [shape: f32[1,128], index: 7, kind: input, shape index: {}]
  %s8 = inlined_call_operand.hbm [shape: bf16[128,512], index: 8, kind: input, shape index: {}]
  %s9 = inlined_call_operand.hbm [shape: bf16[256,128], index: 9, kind: input, shape index: {}]
  %s10 = inlined_call_operand.hbm [shape: f32[64,128], index: 10, kind: output, shape index: {}]
  %s11 = sld [smem:[#allocation0]]
  $region82: #{tpu_custom_call.1} parent=0
    _
  %s13 = ssub.s32 1, %s11
  %s14 = scalar_select 0, %s13, %s11
  $region1: #{tpu_custom_call.1} parent=0
    #allocation2 [shape = 'u8[32768]{0}', space=vmem, size = 0x8000, scoped, tag = 'input window, operand 0, single buffered']
    #allocation3 [shape = 's32[1]{0}', space=sflag, size = 0x4, scoped, tag = 'scoped memory for tpu_custom_call.1']
    #allocation4 [shape = 's32[1]{0}', space=sflag, size = 0x4, scoped, tag = 'scoped memory for tpu_custom_call.1']
    #allocation5 [shape = 'u8[65536]{0}', space=vmem, size = 0x10000, scoped, tag = 'input window, operand 1, single buffered']
    #allocation6 [shape = 's32[1]{0}', space=sflag, size = 0x4, scoped, tag = 'scoped memory for tpu_custom_call.1']
    #allocation7 [shape = 'u8[1536]{0}', space=vmem, size = 0x800, scoped, tag = 'input window, operand 2, single buffered']
    #allocation8 [shape = 'u8[98304]{0}', space=vmem, size = 0x18000, scoped, tag = 'input window, operand 3, single buffered']
    #allocation9 [shape = 's32[1]{0}', space=sflag, size = 0x4, scoped, tag = 'scoped memory for tpu_custom_call.1']
    #allocation10 [shape = 'u8[131072]{0}', space=vmem, size = 0x20000, scoped, tag = 'input window, operand 5, single buffered']
    #allocation11 [shape = 'u8[65536]{0}', space=vmem, size = 0x10000, scoped, tag = 'input window, operand 6, single buffered']
    #allocation12 [shape = 's32[1]{0}', space=sflag, size = 0x4, scoped, tag = 'scoped memory for tpu_custom_call.1']
    #allocation13 [shape = 'u8[131072]{0}', space=vmem, size = 0x20000, scoped, tag = 'input window, operand 8, single buffered']
    #allocation14 [shape = 'u8[65536]{0}', space=vmem, size = 0x10000, scoped, tag = 'input window, operand 9, single buffered']
    #allocation15 [shape = 's32[1]{0}', space=sflag, size = 0x4, scoped, tag = 'scoped memory for tpu_custom_call.1']
    #allocation16 [shape = 'u8[32768]{0}', space=vmem, size = 0x8000, scoped, tag = 'output window, operand 0, single buffered']
    %15 = vsyncpa [#allocation3], 0
    %16 = vsyncpa [#allocation6], 0
    %17 = vsyncpa [#allocation9], 0
    %18 = vsyncpa [#allocation12], 0
    %19 = vsyncpa [#allocation15], 0
    %20 = vsyncpa [#allocation4], 0
    // Predicated region
    $region2: #{tpu_custom_call.1} parent=1 // pred_check
      _
    $region3: #{tpu_custom_call.1} parent=1 // pred_check_branch
      %22 = sbr.rel (0) target = $region5
    $region4: #{tpu_custom_call.1} parent=1 // pred_region
      %24 = vsyncadd [#allocation3], 0
      %s25 = sshll.u32 %s0, 4
      %s26 = int_to_ptr.hbm [resolvable:$true] %s25
      %s27 = sshll.u32 [#allocation2], 4
      %s28 = int_to_ptr.vmem [resolvable:$true] %s27
      %33 = dma.hbm_to_vmem [thread:$0]  %s26, 1024, %s28, [#allocation3], 128, 128, 8
    $region5: #{tpu_custom_call.1} parent=1 // pred_fallthru
      _
    // Predicated region
    $region6: #{tpu_custom_call.1} parent=1 // pred_check
      _
    $region7: #{tpu_custom_call.1} parent=1 // pred_check_branch
      %35 = sbr.rel (0) target = $region9
    $region8: #{tpu_custom_call.1} parent=1 // pred_region
      %37 = vsyncadd [#allocation6], 0
      %s38 = sshll.u32 %s1, 4
      %s39 = int_to_ptr.hbm [resolvable:$true] %s38
      %s40 = sshll.u32 [#allocation5], 4
      %s41 = int_to_ptr.vmem [resolvable:$true] %s40
      %46 = dma.hbm_to_vmem [thread:$0]  %s39, 2048, %s41, [#allocation6], 256, 256, 16
    $region9: #{tpu_custom_call.1} parent=1 // pred_fallthru
      _
    // Predicated region
    $region10: #{tpu_custom_call.1} parent=1 // pred_check
      _
    $region11: #{tpu_custom_call.1} parent=1 // pred_check_branch
      %48 = sbr.rel (0) target = $region13
    $region12: #{tpu_custom_call.1} parent=1 // pred_region
      %50 = vsyncadd [#allocation6], 0
      %s52 = sshll.u32 %s2, 4
      %s53 = int_to_ptr.hbm [resolvable:$true] %s52
      %s54 = sshll.u32 [#allocation7], 4
      %s55 = int_to_ptr.vmem [resolvable:$true] %s54
      %57 = dma.hbm_to_vmem [thread:$0]  %s53, 48, %s55, [#allocation6]
    $region13: #{tpu_custom_call.1} parent=1 // pred_fallthru
      _
    // Predicated region
    $region14: #{tpu_custom_call.1} parent=1 // pred_check
      _
    $region15: #{tpu_custom_call.1} parent=1 // pred_check_branch
      %59 = sbr.rel (0) target = $region17
    $region16: #{tpu_custom_call.1} parent=1 // pred_region
      %61 = vsyncadd [#allocation9], 0
      %s62 = sshll.u32 %s3, 4
      %s63 = int_to_ptr.hbm [resolvable:$true] %s62
      %s64 = sshll.u32 [#allocation8], 4
      %s65 = int_to_ptr.vmem [resolvable:$true] %s64
      %70 = dma.hbm_to_vmem [thread:$0]  %s63, 3072, %s65, [#allocation9], 64, 64, 4
    $region17: #{tpu_custom_call.1} parent=1 // pred_fallthru
      _
    // Predicated region
    $region18: #{tpu_custom_call.1} parent=1 // pred_check
      _
    $region19: #{tpu_custom_call.1} parent=1 // pred_check_branch
      %72 = sbr.rel (0) target = $region21
    $region20: #{tpu_custom_call.1} parent=1 // pred_region
      _
    $region21: #{tpu_custom_call.1} parent=1 // pred_fallthru
      _
    // Predicated region
    $region22: #{tpu_custom_call.1} parent=1 // pred_check
      _
    $region23: #{tpu_custom_call.1} parent=1 // pred_check_branch
      %74 = sbr.rel (0) target = $region25
    $region24: #{tpu_custom_call.1} parent=1 // pred_region
      %76 = vsyncadd [#allocation9], 0
      %s77 = sshll.u32 %s5, 4
      %s78 = int_to_ptr.hbm [resolvable:$true] %s77
      %s79 = sshll.u32 [#allocation10], 4
      %s80 = int_to_ptr.vmem [resolvable:$true] %s79
      %85 = dma.hbm_to_vmem [thread:$0]  %s78, 4096, %s80, [#allocation9], 256, 256, 16
    $region25: #{tpu_custom_call.1} parent=1 // pred_fallthru
      _
    // Predicated region
    $region26: #{tpu_custom_call.1} parent=1 // pred_check
      _
    $region27: #{tpu_custom_call.1} parent=1 // pred_check_branch
      %87 = sbr.rel (0) target = $region29
    $region28: #{tpu_custom_call.1} parent=1 // pred_region
      %89 = vsyncadd [#allocation12], 0
      %s90 = sshll.u32 %s6, 4
      %s91 = int_to_ptr.hbm [resolvable:$true] %s90
      %s92 = sshll.u32 [#allocation11], 4
      %s93 = int_to_ptr.vmem [resolvable:$true] %s92
      %98 = dma.hbm_to_vmem [thread:$0]  %s91, 2048, %s93, [#allocation12], 64, 64, 4
    $region29: #{tpu_custom_call.1} parent=1 // pred_fallthru
      _
    // Predicated region
    $region30: #{tpu_custom_call.1} parent=1 // pred_check
      _
    $region31: #{tpu_custom_call.1} parent=1 // pred_check_branch
      %100 = sbr.rel (0) target = $region33
    $region32: #{tpu_custom_call.1} parent=1 // pred_region
      _
    $region33: #{tpu_custom_call.1} parent=1 // pred_fallthru
      _
    // Predicated region
    $region34: #{tpu_custom_call.1} parent=1 // pred_check
      _
    $region35: #{tpu_custom_call.1} parent=1 // pred_check_branch
      %102 = sbr.rel (0) target = $region37
    $region36: #{tpu_custom_call.1} parent=1 // pred_region
      %104 = vsyncadd [#allocation12], 0
      %s105 = sshll.u32 %s8, 4
      %s106 = int_to_ptr.hbm [resolvable:$true] %s105
      %s107 = sshll.u32 [#allocation13], 4
      %s108 = int_to_ptr.vmem [resolvable:$true] %s107
      %113 = dma.hbm_to_vmem [thread:$0]  %s106, 4096, %s108, [#allocation12], 256, 256, 16
    $region37: #{tpu_custom_call.1} parent=1 // pred_fallthru
      _
    // Predicated region
    $region38: #{tpu_custom_call.1} parent=1 // pred_check
      _
    $region39: #{tpu_custom_call.1} parent=1 // pred_check_branch
      %115 = sbr.rel (0) target = $region41
    $region40: #{tpu_custom_call.1} parent=1 // pred_region
      %117 = vsyncadd [#allocation15], 0
      %s118 = sshll.u32 %s9, 4
      %s119 = int_to_ptr.hbm [resolvable:$true] %s118
      %s120 = sshll.u32 [#allocation14], 4
      %s121 = int_to_ptr.vmem [resolvable:$true] %s120
      %126 = dma.hbm_to_vmem [thread:$0]  %s119, 2048, %s121, [#allocation15], 64, 64, 4
    $region41: #{tpu_custom_call.1} parent=1 // pred_fallthru
      _
    // Predicated region
    $region42: #{tpu_custom_call.1} parent=1 // pred_check
      _
    $region43: #{tpu_custom_call.1} parent=1 // pred_check_branch
      %128 = sbr.rel (0) target = $region45
    $region44: #{tpu_custom_call.1} parent=1 // pred_region
      %130 = dma.done [#allocation3], 1024
    $region45: #{tpu_custom_call.1} parent=1 // pred_fallthru
      _
    // Predicated region
    $region46: #{tpu_custom_call.1} parent=1 // pred_check
      _
    $region47: #{tpu_custom_call.1} parent=1 // pred_check_branch
      %132 = sbr.rel (0) target = $region49
    $region48: #{tpu_custom_call.1} parent=1 // pred_region
      %134 = dma.done [#allocation6], 2048
    $region49: #{tpu_custom_call.1} parent=1 // pred_fallthru
      _
    // Predicated region
    $region50: #{tpu_custom_call.1} parent=1 // pred_check
      _
    $region51: #{tpu_custom_call.1} parent=1 // pred_check_branch
      %136 = sbr.rel (0) target = $region53
    $region52: #{tpu_custom_call.1} parent=1 // pred_region
      %138 = dma.done [#allocation6], 48
    $region53: #{tpu_custom_call.1} parent=1 // pred_fallthru
      _
    // Predicated region
    $region54: #{tpu_custom_call.1} parent=1 // pred_check
      _
    $region55: #{tpu_custom_call.1} parent=1 // pred_check_branch
      %140 = sbr.rel (0) target = $region57
    $region56: #{tpu_custom_call.1} parent=1 // pred_region
      %142 = dma.done [#allocation9], 3072
    $region57: #{tpu_custom_call.1} parent=1 // pred_fallthru
      _
    // Predicated region
    $region58: #{tpu_custom_call.1} parent=1 // pred_check
      _
    $region59: #{tpu_custom_call.1} parent=1 // pred_check_branch
      %144 = sbr.rel (0) target = $region61
    $region60: #{tpu_custom_call.1} parent=1 // pred_region
      %146 = dma.done [#allocation9], 4096
    $region61: #{tpu_custom_call.1} parent=1 // pred_fallthru
      _
    // Predicated region
    $region62: #{tpu_custom_call.1} parent=1 // pred_check
      _
    $region63: #{tpu_custom_call.1} parent=1 // pred_check_branch
      %148 = sbr.rel (0) target = $region65
    $region64: #{tpu_custom_call.1} parent=1 // pred_region
      %150 = dma.done [#allocation12], 2048
    $region65: #{tpu_custom_call.1} parent=1 // pred_fallthru
      _
    // Predicated region
    $region66: #{tpu_custom_call.1} parent=1 // pred_check
      _
    $region67: #{tpu_custom_call.1} parent=1 // pred_check_branch
      %152 = sbr.rel (0) target = $region69
    $region68: #{tpu_custom_call.1} parent=1 // pred_region
      %154 = dma.done [#allocation12], 4096
    $region69: #{tpu_custom_call.1} parent=1 // pred_fallthru
      _
    // Predicated region
    $region70: #{tpu_custom_call.1} parent=1 // pred_check
      _
    $region71: #{tpu_custom_call.1} parent=1 // pred_check_branch
      %156 = sbr.rel (0) target = $region73
    $region72: #{tpu_custom_call.1} parent=1 // pred_region
      %158 = dma.done [#allocation15], 2048
    $region73: #{tpu_custom_call.1} parent=1 // pred_fallthru
      _
    %v159 = vld [vmem:[#allocation2] sm:$0xff]
    %v160 = vld [vmem:[#allocation2 + $0x8] sm:$0xff]
    %v161 = vld [vmem:[#allocation2 + $0x10] sm:$0xff]
    %v162 = vld [vmem:[#allocation2 + $0x18] sm:$0xff]
    %v163 = vld [vmem:[#allocation2 + $0x20] sm:$0xff]
    %v164 = vld [vmem:[#allocation2 + $0x28] sm:$0xff]
    %v165 = vld [vmem:[#allocation2 + $0x30] sm:$0xff]
    %v166 = vld [vmem:[#allocation2 + $0x38] sm:$0xff]
    %v167 = vld [vmem:[#allocation5] sm:$0xff]
    %v168 = vld [vmem:[#allocation5 + $0x8] sm:$0xff]
    %v169 = vld [vmem:[#allocation5 + $0x10] sm:$0xff]
    %v170 = vld [vmem:[#allocation5 + $0x18] sm:$0xff]
    %v171 = vld [vmem:[#allocation5 + $0x20] sm:$0xff]
    %v172 = vld [vmem:[#allocation5 + $0x28] sm:$0xff]
    %v173 = vld [vmem:[#allocation5 + $0x30] sm:$0xff]
    %v174 = vld [vmem:[#allocation5 + $0x38] sm:$0xff]
    %v175 = vld [vmem:[#allocation5 + $0x40] sm:$0xff]
    %v176 = vld [vmem:[#allocation5 + $0x48] sm:$0xff]
    %v177 = vld [vmem:[#allocation5 + $0x50] sm:$0xff]
    %v178 = vld [vmem:[#allocation5 + $0x58] sm:$0xff]
    %v179 = vld [vmem:[#allocation5 + $0x60] sm:$0xff]
    %v180 = vld [vmem:[#allocation5 + $0x68] sm:$0xff]
    %v181 = vld [vmem:[#allocation5 + $0x70] sm:$0xff]
    %v182 = vld [vmem:[#allocation5 + $0x78] sm:$0xff]
    %v183 = vld [vmem:[#allocation7] sm:$0x7]
    %v184 = vlaneseq
    %v185 = vand.u32 %v184, 127
    %v186 = vadd.s32 %v185, 128
    %v187 = vadd.s32 %v185, 256
    %vm188 = vcmp.lt.s32.totalorder %v185, 267
    %vm189 = vcmp.lt.s32.totalorder %v186, 267
    %vm190 = vcmp.lt.s32.totalorder %v187, 267
    %v191 = vsel %vm188, 1, 0
    %v192 = vsel %vm189, 1, 0
    %v193 = vsel %vm190, 1, 0
    %v194 = vcvt.s32.f32 %v191
    %v195 = vcvt.s32.f32 %v192
    %v196 = vcvt.s32.f32 %v193
    %v197 = vmul.f32 %v159, %v194
    %v198 = vmul.f32 %v167, %v195
    %v199 = vmul.f32 %v168, %v196
    %v200 = vmul.f32 %v160, %v194
    %v201 = vmul.f32 %v169, %v195
    %v202 = vmul.f32 %v170, %v196
    %v203 = vmul.f32 %v161, %v194
    %v204 = vmul.f32 %v171, %v195
    %v205 = vmul.f32 %v172, %v196
    %v206 = vmul.f32 %v162, %v194
    %v207 = vmul.f32 %v173, %v195
    %v208 = vmul.f32 %v174, %v196
    %v209 = vmul.f32 %v163, %v194
    %v210 = vmul.f32 %v175, %v195
    %v211 = vmul.f32 %v176, %v196
    %v212 = vmul.f32 %v164, %v194
    %v213 = vmul.f32 %v177, %v195
    %v214 = vmul.f32 %v178, %v196
    %v215 = vmul.f32 %v165, %v194
    %v216 = vmul.f32 %v179, %v195
    %v217 = vmul.f32 %v180, %v196
    %v218 = vmul.f32 %v166, %v194
    %v219 = vmul.f32 %v181, %v195
    %v220 = vmul.f32 %v182, %v196
    %v221 = vadd.f32 %v197, %v198
    %v222 = vadd.f32 %v221, %v199
    %223 = vadd.xlane.f32.xlu0 %v222
    %v224 = vpop.xlane.xlu0 %223
    %v225 = vadd.f32 %v200, %v201
    %v226 = vadd.f32 %v225, %v202
    %227 = vadd.xlane.f32.xlu0 %v226
    %v228 = vpop.xlane.xlu0 %227
    %v229 = vadd.f32 %v203, %v204
    %v230 = vadd.f32 %v229, %v205
    %231 = vadd.xlane.f32.xlu0 %v230
    %v232 = vpop.xlane.xlu0 %231
    %v233 = vadd.f32 %v206, %v207
    %v234 = vadd.f32 %v233, %v208
    %235 = vadd.xlane.f32.xlu0 %v234
    %v236 = vpop.xlane.xlu0 %235
    %v237 = vadd.f32 %v209, %v210
    %v238 = vadd.f32 %v237, %v211
    %239 = vadd.xlane.f32.xlu0 %v238
    %v240 = vpop.xlane.xlu0 %239
    %v241 = vadd.f32 %v212, %v213
    %v242 = vadd.f32 %v241, %v214
    %243 = vadd.xlane.f32.xlu0 %v242
    %v244 = vpop.xlane.xlu0 %243
    %v245 = vadd.f32 %v215, %v216
    %v246 = vadd.f32 %v245, %v217
    %247 = vadd.xlane.f32.xlu0 %v246
    %v248 = vpop.xlane.xlu0 %247
    %v249 = vadd.f32 %v218, %v219
    %v250 = vadd.f32 %v249, %v220
    %251 = vadd.xlane.f32.xlu0 %v250
    %v252 = vpop.xlane.xlu0 %251
    %v253 = vmul.f32 %v224, 0.0037453184
    %v254 = vmul.f32 %v228, 0.0037453184
    %v255 = vmul.f32 %v232, 0.0037453184
    %v256 = vmul.f32 %v236, 0.0037453184
    %v257 = vmul.f32 %v240, 0.0037453184
    %v258 = vmul.f32 %v244, 0.0037453184
    %v259 = vmul.f32 %v248, 0.0037453184
    %v260 = vmul.f32 %v252, 0.0037453184
    %v261 = vsub.f32 %v159, %v253
    %v262 = vsub.f32 %v167, %v253
    %v263 = vsub.f32 %v168, %v253
    %v264 = vsub.f32 %v160, %v254
    %v265 = vsub.f32 %v169, %v254
    %v266 = vsub.f32 %v170, %v254
    %v267 = vsub.f32 %v161, %v255
    %v268 = vsub.f32 %v171, %v255
    %v269 = vsub.f32 %v172, %v255
    %v270 = vsub.f32 %v162, %v256
    %v271 = vsub.f32 %v173, %v256
    %v272 = vsub.f32 %v174, %v256
    %v273 = vsub.f32 %v163, %v257
    %v274 = vsub.f32 %v175, %v257
    %v275 = vsub.f32 %v176, %v257
    %v276 = vsub.f32 %v164, %v258
    %v277 = vsub.f32 %v177, %v258
    %v278 = vsub.f32 %v178, %v258
    %v279 = vsub.f32 %v165, %v259
    %v280 = vsub.f32 %v179, %v259
    %v281 = vsub.f32 %v180, %v259
    %v282 = vsub.f32 %v166, %v260
    %v283 = vsub.f32 %v181, %v260
    %v284 = vsub.f32 %v182, %v260
    %v285 = vmul.f32 %v261, %v194
    %v286 = vmul.f32 %v262, %v195
    %v287 = vmul.f32 %v263, %v196
    %v288 = vmul.f32 %v264, %v194
    %v289 = vmul.f32 %v265, %v195
    %v290 = vmul.f32 %v266, %v196
    %v291 = vmul.f32 %v267, %v194
    %v292 = vmul.f32 %v268, %v195
    %v293 = vmul.f32 %v269, %v196
    %v294 = vmul.f32 %v270, %v194
    %v295 = vmul.f32 %v271, %v195
    %v296 = vmul.f32 %v272, %v196
    %v297 = vmul.f32 %v273, %v194
    %v298 = vmul.f32 %v274, %v195
    %v299 = vmul.f32 %v275, %v196
    %v300 = vmul.f32 %v276, %v194
    %v301 = vmul.f32 %v277, %v195
    %v302 = vmul.f32 %v278, %v196
    %v303 = vmul.f32 %v279, %v194
    %v304 = vmul.f32 %v280, %v195
    %v305 = vmul.f32 %v281, %v196
    %v306 = vmul.f32 %v282, %v194
    %v307 = vmul.f32 %v283, %v195
    %v308 = vmul.f32 %v284, %v196
    %v309 = vmul.f32 %v285, %v285
    %v310 = vmul.f32 %v286, %v286
    %v311 = vmul.f32 %v287, %v287
    %v312 = vmul.f32 %v288, %v288
    %v313 = vmul.f32 %v289, %v289
    %v314 = vmul.f32 %v290, %v290
    %v315 = vmul.f32 %v291, %v291
    %v316 = vmul.f32 %v292, %v292
    %v317 = vmul.f32 %v293, %v293
    %v318 = vmul.f32 %v294, %v294
    %v319 = vmul.f32 %v295, %v295
    %v320 = vmul.f32 %v296, %v296
    %v321 = vmul.f32 %v297, %v297
    %v322 = vmul.f32 %v298, %v298
    %v323 = vmul.f32 %v299, %v299
    %v324 = vmul.f32 %v300, %v300
    %v325 = vmul.f32 %v301, %v301
    %v326 = vmul.f32 %v302, %v302
    %v327 = vmul.f32 %v303, %v303
    %v328 = vmul.f32 %v304, %v304
    %v329 = vmul.f32 %v305, %v305
    %v330 = vmul.f32 %v306, %v306
    %v331 = vmul.f32 %v307, %v307
    %v332 = vmul.f32 %v308, %v308
    %v333 = vadd.f32 %v309, %v310
    %v334 = vadd.f32 %v333, %v311
    %335 = vadd.xlane.f32.xlu0 %v334
    %v336 = vpop.xlane.xlu0 %335
    %v337 = vadd.f32 %v312, %v313
    %v338 = vadd.f32 %v337, %v314
    %339 = vadd.xlane.f32.xlu0 %v338
    %v340 = vpop.xlane.xlu0 %339
    %v341 = vadd.f32 %v315, %v316
    %v342 = vadd.f32 %v341, %v317
    %343 = vadd.xlane.f32.xlu0 %v342
    %v344 = vpop.xlane.xlu0 %343
    %v345 = vadd.f32 %v318, %v319
    %v346 = vadd.f32 %v345, %v320
    %347 = vadd.xlane.f32.xlu0 %v346
    %v348 = vpop.xlane.xlu0 %347
    %v349 = vadd.f32 %v321, %v322
    %v350 = vadd.f32 %v349, %v323
    %351 = vadd.xlane.f32.xlu0 %v350
    %v352 = vpop.xlane.xlu0 %351
    %v353 = vadd.f32 %v324, %v325
    %v354 = vadd.f32 %v353, %v326
    %355 = vadd.xlane.f32.xlu0 %v354
    %v356 = vpop.xlane.xlu0 %355
    %v357 = vadd.f32 %v327, %v328
    %v358 = vadd.f32 %v357, %v329
    %359 = vadd.xlane.f32.xlu0 %v358
    %v360 = vpop.xlane.xlu0 %359
    %v361 = vadd.f32 %v330, %v331
    %v362 = vadd.f32 %v361, %v332
    %363 = vadd.xlane.f32.xlu0 %v362
    %v364 = vpop.xlane.xlu0 %363
    %v365 = vmul.f32 %v336, 0.0037453184
    %v366 = vmul.f32 %v340, 0.0037453184
    %v367 = vmul.f32 %v344, 0.0037453184
    %v368 = vmul.f32 %v348, 0.0037453184
    %v369 = vmul.f32 %v352, 0.0037453184
    %v370 = vmul.f32 %v356, 0.0037453184
    %v371 = vmul.f32 %v360, 0.0037453184
    %v372 = vmul.f32 %v364, 0.0037453184
    %v373 = vadd.f32 %v365, 1e-05
    %v374 = vadd.f32 %v366, 1e-05
    %v375 = vadd.f32 %v367, 1e-05
    %v376 = vadd.f32 %v368, 1e-05
    %v377 = vadd.f32 %v369, 1e-05
    %v378 = vadd.f32 %v370, 1e-05
    %v379 = vadd.f32 %v371, 1e-05
    %v380 = vadd.f32 %v372, 1e-05
    %v381 = vrsqrt.pop %v373
    %v382 = vmul.f32 %v381, %v373
    %v383 = vmul.f32 %v382, %v381
    %v384 = vmul.f32 0.5, %v383
    %v385 = vsub.f32 1.5, %v384
    %v386 = vmul.f32 %v381, %v385
    %vm387 = vweird.f32 %v373
    %vm388 = vweird.f32 %v381
    %vm389 = vmor %vm387, %vm388
    %v390 = vsel %vm389, %v381, %v386
    %v391 = vrsqrt.pop %v374
    %v392 = vmul.f32 %v391, %v374
    %v393 = vmul.f32 %v392, %v391
    %v394 = vmul.f32 0.5, %v393
    %v395 = vsub.f32 1.5, %v394
    %v396 = vmul.f32 %v391, %v395
    %vm397 = vweird.f32 %v374
    %vm398 = vweird.f32 %v391
    %vm399 = vmor %vm397, %vm398
    %v400 = vsel %vm399, %v391, %v396
    %v401 = vrsqrt.pop %v375
    %v402 = vmul.f32 %v401, %v375
    %v403 = vmul.f32 %v402, %v401
    %v404 = vmul.f32 0.5, %v403
    %v405 = vsub.f32 1.5, %v404
    %v406 = vmul.f32 %v401, %v405
    %vm407 = vweird.f32 %v375
    %vm408 = vweird.f32 %v401
    %vm409 = vmor %vm407, %vm408
    %v410 = vsel %vm409, %v401, %v406
    %v411 = vrsqrt.pop %v376
    %v412 = vmul.f32 %v411, %v376
    %v413 = vmul.f32 %v412, %v411
    %v414 = vmul.f32 0.5, %v413
    %v415 = vsub.f32 1.5, %v414
    %v416 = vmul.f32 %v411, %v415
    %vm417 = vweird.f32 %v376
    %vm418 = vweird.f32 %v411
    %vm419 = vmor %vm417, %vm418
    %v420 = vsel %vm419, %v411, %v416
    %v421 = vrsqrt.pop %v377
    %v422 = vmul.f32 %v421, %v377
    %v423 = vmul.f32 %v422, %v421
    %v424 = vmul.f32 0.5, %v423
    %v425 = vsub.f32 1.5, %v424
    %v426 = vmul.f32 %v421, %v425
    %vm427 = vweird.f32 %v377
    %vm428 = vweird.f32 %v421
    %vm429 = vmor %vm427, %vm428
    %v430 = vsel %vm429, %v421, %v426
    %v431 = vrsqrt.pop %v378
    %v432 = vmul.f32 %v431, %v378
    %v433 = vmul.f32 %v432, %v431
    %v434 = vmul.f32 0.5, %v433
    %v435 = vsub.f32 1.5, %v434
    %v436 = vmul.f32 %v431, %v435
    %vm437 = vweird.f32 %v378
    %vm438 = vweird.f32 %v431
    %vm439 = vmor %vm437, %vm438
    %v440 = vsel %vm439, %v431, %v436
    %v441 = vrsqrt.pop %v379
    %v442 = vmul.f32 %v441, %v379
    %v443 = vmul.f32 %v442, %v441
    %v444 = vmul.f32 0.5, %v443
    %v445 = vsub.f32 1.5, %v444
    %v446 = vmul.f32 %v441, %v445
    %vm447 = vweird.f32 %v379
    %vm448 = vweird.f32 %v441
    %vm449 = vmor %vm447, %vm448
    %v450 = vsel %vm449, %v441, %v446
    %v451 = vrsqrt.pop %v380
    %v452 = vmul.f32 %v451, %v380
    %v453 = vmul.f32 %v452, %v451
    %v454 = vmul.f32 0.5, %v453
    %v455 = vsub.f32 1.5, %v454
    %v456 = vmul.f32 %v451, %v455
    %vm457 = vweird.f32 %v380
    %vm458 = vweird.f32 %v451
    %vm459 = vmor %vm457, %vm458
    %v460 = vsel %vm459, %v451, %v456
    %v461 = vmul.f32 %v285, %v390
    %v462 = vmul.f32 %v286, %v390
    %v463 = vmul.f32 %v287, %v390
    %v464 = vmul.f32 %v288, %v400
    %v465 = vmul.f32 %v289, %v400
    %v466 = vmul.f32 %v290, %v400
    %v467 = vmul.f32 %v291, %v410
    %v468 = vmul.f32 %v292, %v410
    %v469 = vmul.f32 %v293, %v410
    %v470 = vmul.f32 %v294, %v420
    %v471 = vmul.f32 %v295, %v420
    %v472 = vmul.f32 %v296, %v420
    %v473 = vmul.f32 %v297, %v430
    %v474 = vmul.f32 %v298, %v430
    %v475 = vmul.f32 %v299, %v430
    %v476 = vmul.f32 %v300, %v440
    %v477 = vmul.f32 %v301, %v440
    %v478 = vmul.f32 %v302, %v440
    %v479 = vmul.f32 %v303, %v450
    %v480 = vmul.f32 %v304, %v450
    %v481 = vmul.f32 %v305, %v450
    %v482 = vmul.f32 %v306, %v460
    %v483 = vmul.f32 %v307, %v460
    %v484 = vmul.f32 %v308, %v460
    %v486 = vperm.slane %v183, 0
    %v487 = vperm.slane %v183, 1
    %v488 = vperm.slane %v183, 2
    %v492 = vmul.f32 %v461, %v486
    %v493 = vmul.f32 %v462, %v487
    %v494 = vmul.f32 %v463, %v488
    %v495 = vmul.f32 %v464, %v486
    %v496 = vmul.f32 %v465, %v487
    %v497 = vmul.f32 %v466, %v488
    %v498 = vmul.f32 %v467, %v486
    %v499 = vmul.f32 %v468, %v487
    %v500 = vmul.f32 %v469, %v488
    %v501 = vmul.f32 %v470, %v486
    %v502 = vmul.f32 %v471, %v487
    %v503 = vmul.f32 %v472, %v488
    %v504 = vmul.f32 %v473, %v486
    %v505 = vmul.f32 %v474, %v487
    %v506 = vmul.f32 %v475, %v488
    %v507 = vmul.f32 %v476, %v486
    %v508 = vmul.f32 %v477, %v487
    %v509 = vmul.f32 %v478, %v488
    %v510 = vmul.f32 %v479, %v486
    %v511 = vmul.f32 %v480, %v487
    %v512 = vmul.f32 %v481, %v488
    %v513 = vmul.f32 %v482, %v486
    %v514 = vmul.f32 %v483, %v487
    %v515 = vmul.f32 %v484, %v488
    %v516 = vpack.c.bf16 %v495, %v492
    %v517 = vpack.c.bf16 %v496, %v493
    %v518 = vpack.c.bf16 %v497, %v494
    %v519 = vpack.c.bf16 %v501, %v498
    %v520 = vpack.c.bf16 %v502, %v499
    %v521 = vpack.c.bf16 %v503, %v500
    %v522 = vpack.c.bf16 %v507, %v504
    %v523 = vpack.c.bf16 %v508, %v505
    %v524 = vpack.c.bf16 %v509, %v506
    %v525 = vpack.c.bf16 %v513, %v510
    %v526 = vpack.c.bf16 %v514, %v511
    %v527 = vpack.c.bf16 %v515, %v512
    %v528 = vld [vmem:[#allocation8] sm:$0xf]
    %v529 = vld [vmem:[#allocation8 + $0x4] sm:$0xf]
    %v530 = vld [vmem:[#allocation8 + $0x8] sm:$0xf]
    %v531 = vld [vmem:[#allocation8 + $0xc] sm:$0xf]
    %v532 = vld [vmem:[#allocation8 + $0x10] sm:$0xf]
    %v533 = vld [vmem:[#allocation8 + $0x14] sm:$0xf]
    %v534 = vld [vmem:[#allocation8 + $0x18] sm:$0xf]
    %v535 = vld [vmem:[#allocation8 + $0x1c] sm:$0xf]
    %v536 = vld [vmem:[#allocation8 + $0x20] sm:$0xf]
    %v537 = vld [vmem:[#allocation8 + $0x24] sm:$0xf]
    %v538 = vld [vmem:[#allocation8 + $0x28] sm:$0xf]
    %v539 = vld [vmem:[#allocation8 + $0x2c] sm:$0xf]
    %v540 = vld [vmem:[#allocation8 + $0x30] sm:$0xf]
    %v541 = vld [vmem:[#allocation8 + $0x34] sm:$0xf]
    %v542 = vld [vmem:[#allocation8 + $0x38] sm:$0xf]
    %v543 = vld [vmem:[#allocation8 + $0x3c] sm:$0xf]
    %v544 = vld [vmem:[#allocation8 + $0x40] sm:$0xf]
    %v545 = vld [vmem:[#allocation8 + $0x44] sm:$0xf]
    %v546 = vld [vmem:[#allocation8 + $0x48] sm:$0xf]
    %v547 = vld [vmem:[#allocation8 + $0x4c] sm:$0xf]
    %v548 = vld [vmem:[#allocation8 + $0x50] sm:$0xf]
    %v549 = vld [vmem:[#allocation8 + $0x54] sm:$0xf]
    %v550 = vld [vmem:[#allocation8 + $0x58] sm:$0xf]
    %v551 = vld [vmem:[#allocation8 + $0x5c] sm:$0xf]
    %v552 = vld [vmem:[#allocation8 + $0x60] sm:$0xf]
    %v553 = vld [vmem:[#allocation8 + $0x64] sm:$0xf]
    %v554 = vld [vmem:[#allocation8 + $0x68] sm:$0xf]
    %v555 = vld [vmem:[#allocation8 + $0x6c] sm:$0xf]
    %v556 = vld [vmem:[#allocation8 + $0x70] sm:$0xf]
    %v557 = vld [vmem:[#allocation8 + $0x74] sm:$0xf]
    %v558 = vld [vmem:[#allocation8 + $0x78] sm:$0xf]
    %v559 = vld [vmem:[#allocation8 + $0x7c] sm:$0xf]
    %v560 = vld [vmem:[#allocation8 + $0x80] sm:$0xf]
    %v561 = vld [vmem:[#allocation8 + $0x84] sm:$0xf]
    %v562 = vld [vmem:[#allocation8 + $0x88] sm:$0xf]
    %v563 = vld [vmem:[#allocation8 + $0x8c] sm:$0xf]
    %v564 = vld [vmem:[#allocation8 + $0x90] sm:$0xf]
    %v565 = vld [vmem:[#allocation8 + $0x94] sm:$0xf]
    %v566 = vld [vmem:[#allocation8 + $0x98] sm:$0xf]
    %v567 = vld [vmem:[#allocation8 + $0x9c] sm:$0xf]
    %v568 = vld [vmem:[#allocation8 + $0xa0] sm:$0xf]
    %v569 = vld [vmem:[#allocation8 + $0xa4] sm:$0xf]
    %v570 = vld [vmem:[#allocation8 + $0xa8] sm:$0xf]
    %v571 = vld [vmem:[#allocation8 + $0xac] sm:$0xf]
    %v572 = vld [vmem:[#allocation8 + $0xb0] sm:$0xf]
    %v573 = vld [vmem:[#allocation8 + $0xb4] sm:$0xf]
    %v574 = vld [vmem:[#allocation8 + $0xb8] sm:$0xf]
    %v575 = vld [vmem:[#allocation8 + $0xbc] sm:$0xf]
    %v624 = vunpack.c.l.b16 %v528
    %v625 = vunpack.c.l.b16 %v529
    %v626 = vunpack.c.l.b16 %v530
    %v627 = vunpack.c.l.b16 %v531
    %v628 = vunpack.c.l.b16 %v532
    %v629 = vunpack.c.l.b16 %v533
    %v630 = vunpack.c.l.b16 %v534
    %v631 = vunpack.c.l.b16 %v535
    %v632 = vunpack.c.l.b16 %v536
    %v633 = vunpack.c.l.b16 %v537
    %v634 = vunpack.c.l.b16 %v538
    %v635 = vunpack.c.l.b16 %v539
    %v636 = vunpack.c.l.b16 %v540
    %v637 = vunpack.c.l.b16 %v541
    %v638 = vunpack.c.l.b16 %v542
    %v639 = vunpack.c.l.b16 %v543
    %v640 = vunpack.c.l.b16 %v544
    %v641 = vunpack.c.l.b16 %v545
    %v642 = vunpack.c.l.b16 %v546
    %v643 = vunpack.c.l.b16 %v547
    %v644 = vunpack.c.l.b16 %v548
    %v645 = vunpack.c.l.b16 %v549
    %v646 = vunpack.c.l.b16 %v550
    %v647 = vunpack.c.l.b16 %v551
    %v648 = vunpack.c.l.b16 %v552
    %v649 = vunpack.c.l.b16 %v553
    %v650 = vunpack.c.l.b16 %v554
    %v651 = vunpack.c.l.b16 %v555
    %v652 = vunpack.c.l.b16 %v556
    %v653 = vunpack.c.l.b16 %v557
    %v654 = vunpack.c.l.b16 %v558
    %v655 = vunpack.c.l.b16 %v559
    %v656 = vunpack.c.l.b16 %v560
    %v657 = vunpack.c.l.b16 %v561
    %v658 = vunpack.c.l.b16 %v562
    %v659 = vunpack.c.l.b16 %v563
    %v660 = vunpack.c.l.b16 %v564
    %v661 = vunpack.c.l.b16 %v565
    %v662 = vunpack.c.l.b16 %v566
    %v663 = vunpack.c.l.b16 %v567
    %v664 = vunpack.c.l.b16 %v568
    %v665 = vunpack.c.l.b16 %v569
    %v666 = vunpack.c.l.b16 %v570
    %v667 = vunpack.c.l.b16 %v571
    %v668 = vunpack.c.l.b16 %v572
    %v669 = vunpack.c.l.b16 %v573
    %v670 = vunpack.c.l.b16 %v574
    %v671 = vunpack.c.l.b16 %v575
    %v672 = vpack.c.b16 %v625, %v624
    %v673 = vpack.c.b16 %v627, %v626
    %v674 = vpack.c.b16 %v629, %v628
    %v675 = vpack.c.b16 %v631, %v630
    %v676 = vpack.c.b16 %v633, %v632
    %v677 = vpack.c.b16 %v635, %v634
    %v678 = vpack.c.b16 %v637, %v636
    %v679 = vpack.c.b16 %v639, %v638
    %v680 = vpack.c.b16 %v641, %v640
    %v681 = vpack.c.b16 %v643, %v642
    %v682 = vpack.c.b16 %v645, %v644
    %v683 = vpack.c.b16 %v647, %v646
    %v684 = vpack.c.b16 %v649, %v648
    %v685 = vpack.c.b16 %v651, %v650
    %v686 = vpack.c.b16 %v653, %v652
    %v687 = vpack.c.b16 %v655, %v654
    %v688 = vpack.c.b16 %v657, %v656
    %v689 = vpack.c.b16 %v659, %v658
    %v690 = vpack.c.b16 %v661, %v660
    %v691 = vpack.c.b16 %v663, %v662
    %v692 = vpack.c.b16 %v665, %v664
    %v693 = vpack.c.b16 %v667, %v666
    %v694 = vpack.c.b16 %v669, %v668
    %v695 = vpack.c.b16 %v671, %v670
    %720 = vmatpush.bf16.msra.mxu0 %v679
    %721 = vmatpush.bf16.msra.mxu0 %v678
    %722 = vmatpush.bf16.msra.mxu0 %v677
    %723 = vmatpush.bf16.msra.mxu0 %v676
    %724 = vmatpush.bf16.msra.mxu0 %v675
    %725 = vmatpush.bf16.msra.mxu0 %v674
    %726 = vmatpush.bf16.msra.mxu0 %v673
    %727 = vmatpush.bf16.msra.mxu0 %v672
    %728 = vmatmul.bf16.gmra.mxu0 %v516
    %v729 = vpop.f32.mrf.mxu0
    %v730 = vadd.f32 0.0, %v729
    %v731 = vpop.f32.mrf.mxu0
    %v732 = vadd.f32 0.0, %v731
    %733 = vmatmul.bf16.gmra.mxu0 %v519
    %v734 = vpop.f32.mrf.mxu0
    %v735 = vadd.f32 0.0, %v734
    %v736 = vpop.f32.mrf.mxu0
    %v737 = vadd.f32 0.0, %v736
    %738 = vmatmul.bf16.gmra.mxu0 %v522
    %v739 = vpop.f32.mrf.mxu0
    %v740 = vadd.f32 0.0, %v739
    %v741 = vpop.f32.mrf.mxu0
    %v742 = vadd.f32 0.0, %v741
    %743 = vmatmul.bf16.gmra.mxu0 %v525
    %v744 = vpop.f32.mrf.mxu0
    %v745 = vadd.f32 0.0, %v744
    %v746 = vpop.f32.mrf.mxu0
    %v747 = vadd.f32 0.0, %v746
    %748 = vdwg.mxu0
    %749 = vmatpush.bf16.msra.mxu0 %v687
    %750 = vmatpush.bf16.msra.mxu0 %v686
    %751 = vmatpush.bf16.msra.mxu0 %v685
    %752 = vmatpush.bf16.msra.mxu0 %v684
    %753 = vmatpush.bf16.msra.mxu0 %v683
    %754 = vmatpush.bf16.msra.mxu0 %v682
    %755 = vmatpush.bf16.msra.mxu0 %v681
    %756 = vmatpush.bf16.msra.mxu0 %v680
    %757 = vmatmul.bf16.gmra.mxu0 %v517
    %v758 = vpop.f32.mrf.mxu0
    %v759 = vadd.f32 %v730, %v758
    %v760 = vpop.f32.mrf.mxu0
    %v761 = vadd.f32 %v732, %v760
    %762 = vmatmul.bf16.gmra.mxu0 %v520
    %v763 = vpop.f32.mrf.mxu0
    %v764 = vadd.f32 %v735, %v763
    %v765 = vpop.f32.mrf.mxu0
    %v766 = vadd.f32 %v737, %v765
    %767 = vmatmul.bf16.gmra.mxu0 %v523
    %v768 = vpop.f32.mrf.mxu0
    %v769 = vadd.f32 %v740, %v768
    %v770 = vpop.f32.mrf.mxu0
    %v771 = vadd.f32 %v742, %v770
    %772 = vmatmul.bf16.gmra.mxu0 %v526
    %v773 = vpop.f32.mrf.mxu0
    %v774 = vadd.f32 %v745, %v773
    %v775 = vpop.f32.mrf.mxu0
    %v776 = vadd.f32 %v747, %v775
    %777 = vdwg.mxu0
    %778 = vmatpush.bf16.msra.mxu0 %v695
    %779 = vmatpush.bf16.msra.mxu0 %v694
    %780 = vmatpush.bf16.msra.mxu0 %v693
    %781 = vmatpush.bf16.msra.mxu0 %v692
    %782 = vmatpush.bf16.msra.mxu0 %v691
    %783 = vmatpush.bf16.msra.mxu0 %v690
    %784 = vmatpush.bf16.msra.mxu0 %v689
    %785 = vmatpush.bf16.msra.mxu0 %v688
    %786 = vmatmul.bf16.gmra.mxu0 %v518
    %v787 = vpop.f32.mrf.mxu0
    %v788 = vadd.f32 %v759, %v787
    %v789 = vpop.f32.mrf.mxu0
    %v790 = vadd.f32 %v761, %v789
    %791 = vmatmul.bf16.gmra.mxu0 %v521
    %v792 = vpop.f32.mrf.mxu0
    %v793 = vadd.f32 %v764, %v792
    %v794 = vpop.f32.mrf.mxu0
    %v795 = vadd.f32 %v766, %v794
    %796 = vmatmul.bf16.gmra.mxu0 %v524
    %v797 = vpop.f32.mrf.mxu0
    %v798 = vadd.f32 %v769, %v797
    %v799 = vpop.f32.mrf.mxu0
    %v800 = vadd.f32 %v771, %v799
    %801 = vmatmul.bf16.gmra.mxu0 %v527
    %v802 = vpop.f32.mrf.mxu0
    %v803 = vadd.f32 %v774, %v802
    %v804 = vpop.f32.mrf.mxu0
    %v805 = vadd.f32 %v776, %v804
    %806 = vdwg.mxu0
    %v807 = vld [vmem:[%s4] sm:$0x1]
    %v808 = vld [vmem:[#allocation10] sm:$0xff]
    %v809 = vld [vmem:[#allocation10 + $0x8] sm:$0xff]
    %v810 = vld [vmem:[#allocation10 + $0x10] sm:$0xff]
    %v811 = vld [vmem:[#allocation10 + $0x18] sm:$0xff]
    %v812 = vld [vmem:[#allocation10 + $0x20] sm:$0xff]
    %v813 = vld [vmem:[#allocation10 + $0x28] sm:$0xff]
    %v814 = vld [vmem:[#allocation10 + $0x30] sm:$0xff]
    %v815 = vld [vmem:[#allocation10 + $0x38] sm:$0xff]
    %v816 = vld [vmem:[#allocation10 + $0x40] sm:$0xff]
    %v817 = vld [vmem:[#allocation10 + $0x48] sm:$0xff]
    %v818 = vld [vmem:[#allocation10 + $0x50] sm:$0xff]
    %v819 = vld [vmem:[#allocation10 + $0x58] sm:$0xff]
    %v820 = vld [vmem:[#allocation10 + $0x60] sm:$0xff]
    %v821 = vld [vmem:[#allocation10 + $0x68] sm:$0xff]
    %v822 = vld [vmem:[#allocation10 + $0x70] sm:$0xff]
    %v823 = vld [vmem:[#allocation10 + $0x78] sm:$0xff]
    %v824 = vld [vmem:[#allocation10 + $0x80] sm:$0xff]
    %v825 = vld [vmem:[#allocation10 + $0x88] sm:$0xff]
    %v826 = vld [vmem:[#allocation10 + $0x90] sm:$0xff]
    %v827 = vld [vmem:[#allocation10 + $0x98] sm:$0xff]
    %v828 = vld [vmem:[#allocation10 + $0xa0] sm:$0xff]
    %v829 = vld [vmem:[#allocation10 + $0xa8] sm:$0xff]
    %v830 = vld [vmem:[#allocation10 + $0xb0] sm:$0xff]
    %v831 = vld [vmem:[#allocation10 + $0xb8] sm:$0xff]
    %v832 = vld [vmem:[#allocation10 + $0xc0] sm:$0xff]
    %v833 = vld [vmem:[#allocation10 + $0xc8] sm:$0xff]
    %v834 = vld [vmem:[#allocation10 + $0xd0] sm:$0xff]
    %v835 = vld [vmem:[#allocation10 + $0xd8] sm:$0xff]
    %v836 = vld [vmem:[#allocation10 + $0xe0] sm:$0xff]
    %v837 = vld [vmem:[#allocation10 + $0xe8] sm:$0xff]
    %v838 = vld [vmem:[#allocation10 + $0xf0] sm:$0xff]
    %v839 = vld [vmem:[#allocation10 + $0xf8] sm:$0xff]
    %v840 = vld [vmem:[#allocation11] sm:$0xf]
    %v841 = vld [vmem:[#allocation11 + $0x4] sm:$0xf]
    %v842 = vld [vmem:[#allocation11 + $0x8] sm:$0xf]
    %v843 = vld [vmem:[#allocation11 + $0xc] sm:$0xf]
    %v844 = vld [vmem:[#allocation11 + $0x10] sm:$0xf]
    %v845 = vld [vmem:[#allocation11 + $0x14] sm:$0xf]
    %v846 = vld [vmem:[#allocation11 + $0x18] sm:$0xf]
    %v847 = vld [vmem:[#allocation11 + $0x1c] sm:$0xf]
    %v848 = vld [vmem:[#allocation11 + $0x20] sm:$0xf]
    %v849 = vld [vmem:[#allocation11 + $0x24] sm:$0xf]
    %v850 = vld [vmem:[#allocation11 + $0x28] sm:$0xf]
    %v851 = vld [vmem:[#allocation11 + $0x2c] sm:$0xf]
    %v852 = vld [vmem:[#allocation11 + $0x30] sm:$0xf]
    %v853 = vld [vmem:[#allocation11 + $0x34] sm:$0xf]
    %v854 = vld [vmem:[#allocation11 + $0x38] sm:$0xf]
    %v855 = vld [vmem:[#allocation11 + $0x3c] sm:$0xf]
    %v856 = vld [vmem:[#allocation11 + $0x40] sm:$0xf]
    %v857 = vld [vmem:[#allocation11 + $0x44] sm:$0xf]
    %v858 = vld [vmem:[#allocation11 + $0x48] sm:$0xf]
    %v859 = vld [vmem:[#allocation11 + $0x4c] sm:$0xf]
    %v860 = vld [vmem:[#allocation11 + $0x50] sm:$0xf]
    %v861 = vld [vmem:[#allocation11 + $0x54] sm:$0xf]
    %v862 = vld [vmem:[#allocation11 + $0x58] sm:$0xf]
    %v863 = vld [vmem:[#allocation11 + $0x5c] sm:$0xf]
    %v864 = vld [vmem:[#allocation11 + $0x60] sm:$0xf]
    %v865 = vld [vmem:[#allocation11 + $0x64] sm:$0xf]
    %v866 = vld [vmem:[#allocation11 + $0x68] sm:$0xf]
    %v867 = vld [vmem:[#allocation11 + $0x6c] sm:$0xf]
    %v868 = vld [vmem:[#allocation11 + $0x70] sm:$0xf]
    %v869 = vld [vmem:[#allocation11 + $0x74] sm:$0xf]
    %v870 = vld [vmem:[#allocation11 + $0x78] sm:$0xf]
    %v871 = vld [vmem:[#allocation11 + $0x7c] sm:$0xf]
    %872 = vadd.xlane.f32.xlu0 %v788
    %v873 = vpop.xlane.xlu0 %872
    %874 = vadd.xlane.f32.xlu0 %v790
    %v875 = vpop.xlane.xlu0 %874
    %876 = vadd.xlane.f32.xlu0 %v793
    %v877 = vpop.xlane.xlu0 %876
    %878 = vadd.xlane.f32.xlu0 %v795
    %v879 = vpop.xlane.xlu0 %878
    %880 = vadd.xlane.f32.xlu0 %v798
    %v881 = vpop.xlane.xlu0 %880
    %882 = vadd.xlane.f32.xlu0 %v800
    %v883 = vpop.xlane.xlu0 %882
    %884 = vadd.xlane.f32.xlu0 %v803
    %v885 = vpop.xlane.xlu0 %884
    %886 = vadd.xlane.f32.xlu0 %v805
    %v887 = vpop.xlane.xlu0 %886
    %v888 = vrcp.pop 128.0
    %v889 = vmul.f32 128.0, %v888
    %v890 = vsub.f32 1.0, %v889
    %v891 = vmul.f32 %v888, %v890
    %v892 = vadd.f32 %v888, %v891
    %vm893 = vweird.f32 %v888
    %v894 = vsel %vm893, %v888, %v892
    %v895 = vmul.f32 %v873, %v894
    %v896 = vmul.f32 %v875, %v894
    %v897 = vmul.f32 %v877, %v894
    %v898 = vmul.f32 %v879, %v894
    %v899 = vmul.f32 %v881, %v894
    %v900 = vmul.f32 %v883, %v894
    %v901 = vmul.f32 %v885, %v894
    %v902 = vmul.f32 %v887, %v894
    %v903 = vsub.f32 %v788, %v895
    %v904 = vsub.f32 %v790, %v896
    %v905 = vsub.f32 %v793, %v897
    %v906 = vsub.f32 %v795, %v898
    %v907 = vsub.f32 %v798, %v899
    %v908 = vsub.f32 %v800, %v900
    %v909 = vsub.f32 %v803, %v901
    %v910 = vsub.f32 %v805, %v902
    %v911 = vmul.f32 %v903, %v903
    %v912 = vmul.f32 %v904, %v904
    %v913 = vmul.f32 %v905, %v905
    %v914 = vmul.f32 %v906, %v906
    %v915 = vmul.f32 %v907, %v907
    %v916 = vmul.f32 %v908, %v908
    %v917 = vmul.f32 %v909, %v909
    %v918 = vmul.f32 %v910, %v910
    %919 = vadd.xlane.f32.xlu0 %v911
    %v920 = vpop.xlane.xlu0 %919
    %921 = vadd.xlane.f32.xlu0 %v912
    %v922 = vpop.xlane.xlu0 %921
    %923 = vadd.xlane.f32.xlu0 %v913
    %v924 = vpop.xlane.xlu0 %923
    %925 = vadd.xlane.f32.xlu0 %v914
    %v926 = vpop.xlane.xlu0 %925
    %927 = vadd.xlane.f32.xlu0 %v915
    %v928 = vpop.xlane.xlu0 %927
    %929 = vadd.xlane.f32.xlu0 %v916
    %v930 = vpop.xlane.xlu0 %929
    %931 = vadd.xlane.f32.xlu0 %v917
    %v932 = vpop.xlane.xlu0 %931
    %933 = vadd.xlane.f32.xlu0 %v918
    %v934 = vpop.xlane.xlu0 %933
    %v935 = vmul.f32 %v920, %v894
    %v936 = vmul.f32 %v922, %v894
    %v937 = vmul.f32 %v924, %v894
    %v938 = vmul.f32 %v926, %v894
    %v939 = vmul.f32 %v928, %v894
    %v940 = vmul.f32 %v930, %v894
    %v941 = vmul.f32 %v932, %v894
    %v942 = vmul.f32 %v934, %v894
    %v943 = vadd.f32 %v935, 1e-05
    %v944 = vadd.f32 %v936, 1e-05
    %v945 = vadd.f32 %v937, 1e-05
    %v946 = vadd.f32 %v938, 1e-05
    %v947 = vadd.f32 %v939, 1e-05
    %v948 = vadd.f32 %v940, 1e-05
    %v949 = vadd.f32 %v941, 1e-05
    %v950 = vadd.f32 %v942, 1e-05
    %v951 = vrsqrt.pop %v943
    %v952 = vmul.f32 %v951, %v943
    %v953 = vmul.f32 %v952, %v951
    %v954 = vmul.f32 0.5, %v953
    %v955 = vsub.f32 1.5, %v954
    %v956 = vmul.f32 %v951, %v955
    %vm957 = vweird.f32 %v943
    %vm958 = vweird.f32 %v951
    %vm959 = vmor %vm957, %vm958
    %v960 = vsel %vm959, %v951, %v956
    %v961 = vrsqrt.pop %v944
    %v962 = vmul.f32 %v961, %v944
    %v963 = vmul.f32 %v962, %v961
    %v964 = vmul.f32 0.5, %v963
    %v965 = vsub.f32 1.5, %v964
    %v966 = vmul.f32 %v961, %v965
    %vm967 = vweird.f32 %v944
    %vm968 = vweird.f32 %v961
    %vm969 = vmor %vm967, %vm968
    %v970 = vsel %vm969, %v961, %v966
    %v971 = vrsqrt.pop %v945
    %v972 = vmul.f32 %v971, %v945
    %v973 = vmul.f32 %v972, %v971
    %v974 = vmul.f32 0.5, %v973
    %v975 = vsub.f32 1.5, %v974
    %v976 = vmul.f32 %v971, %v975
    %vm977 = vweird.f32 %v945
    %vm978 = vweird.f32 %v971
    %vm979 = vmor %vm977, %vm978
    %v980 = vsel %vm979, %v971, %v976
    %v981 = vrsqrt.pop %v946
    %v982 = vmul.f32 %v981, %v946
    %v983 = vmul.f32 %v982, %v981
    %v984 = vmul.f32 0.5, %v983
    %v985 = vsub.f32 1.5, %v984
    %v986 = vmul.f32 %v981, %v985
    %vm987 = vweird.f32 %v946
    %vm988 = vweird.f32 %v981
    %vm989 = vmor %vm987, %vm988
    %v990 = vsel %vm989, %v981, %v986
    %v991 = vrsqrt.pop %v947
    %v992 = vmul.f32 %v991, %v947
    %v993 = vmul.f32 %v992, %v991
    %v994 = vmul.f32 0.5, %v993
    %v995 = vsub.f32 1.5, %v994
    %v996 = vmul.f32 %v991, %v995
    %vm997 = vweird.f32 %v947
    %vm998 = vweird.f32 %v991
    %vm999 = vmor %vm997, %vm998
    %v1000 = vsel %vm999, %v991, %v996
    %v1001 = vrsqrt.pop %v948
    %v1002 = vmul.f32 %v1001, %v948
    %v1003 = vmul.f32 %v1002, %v1001
    %v1004 = vmul.f32 0.5, %v1003
    %v1005 = vsub.f32 1.5, %v1004
    %v1006 = vmul.f32 %v1001, %v1005
    %vm1007 = vweird.f32 %v948
    %vm1008 = vweird.f32 %v1001
    %vm1009 = vmor %vm1007, %vm1008
    %v1010 = vsel %vm1009, %v1001, %v1006
    %v1011 = vrsqrt.pop %v949
    %v1012 = vmul.f32 %v1011, %v949
    %v1013 = vmul.f32 %v1012, %v1011
    %v1014 = vmul.f32 0.5, %v1013
    %v1015 = vsub.f32 1.5, %v1014
    %v1016 = vmul.f32 %v1011, %v1015
    %vm1017 = vweird.f32 %v949
    %vm1018 = vweird.f32 %v1011
    %vm1019 = vmor %vm1017, %vm1018
    %v1020 = vsel %vm1019, %v1011, %v1016
    %v1021 = vrsqrt.pop %v950
    %v1022 = vmul.f32 %v1021, %v950
    %v1023 = vmul.f32 %v1022, %v1021
    %v1024 = vmul.f32 0.5, %v1023
    %v1025 = vsub.f32 1.5, %v1024
    %v1026 = vmul.f32 %v1021, %v1025
    %vm1027 = vweird.f32 %v950
    %vm1028 = vweird.f32 %v1021
    %vm1029 = vmor %vm1027, %vm1028
    %v1030 = vsel %vm1029, %v1021, %v1026
    %v1031 = vmul.f32 %v903, %v960
    %v1032 = vmul.f32 %v904, %v970
    %v1033 = vmul.f32 %v905, %v980
    %v1034 = vmul.f32 %v906, %v990
    %v1035 = vmul.f32 %v907, %v1000
    %v1036 = vmul.f32 %v908, %v1010
    %v1037 = vmul.f32 %v909, %v1020
    %v1038 = vmul.f32 %v910, %v1030
    %v1040 = vperm.slane %v807, 0
    %v1042 = vmul.f32 %v1031, %v1040
    %v1043 = vmul.f32 %v1032, %v1040
    %v1044 = vmul.f32 %v1033, %v1040
    %v1045 = vmul.f32 %v1034, %v1040
    %v1046 = vmul.f32 %v1035, %v1040
    %v1047 = vmul.f32 %v1036, %v1040
    %v1048 = vmul.f32 %v1037, %v1040
    %v1049 = vmul.f32 %v1038, %v1040
    %v1050 = vpack.c.bf16 %v1043, %v1042
    %v1051 = vpack.c.bf16 %v1045, %v1044
    %v1052 = vpack.c.bf16 %v1047, %v1046
    %v1053 = vpack.c.bf16 %v1049, %v1048
    %v1086 = vunpack.c.l.b16 %v808
    %v1087 = vunpack.c.h.b16 %v808
    %v1088 = vunpack.c.l.b16 %v809
    %v1089 = vunpack.c.h.b16 %v809
    %v1090 = vunpack.c.l.b16 %v810
    %v1091 = vunpack.c.h.b16 %v810
    %v1092 = vunpack.c.l.b16 %v811
    %v1093 = vunpack.c.h.b16 %v811
    %v1094 = vunpack.c.l.b16 %v812
    %v1095 = vunpack.c.h.b16 %v812
    %v1096 = vunpack.c.l.b16 %v813
    %v1097 = vunpack.c.h.b16 %v813
    %v1098 = vunpack.c.l.b16 %v814
    %v1099 = vunpack.c.h.b16 %v814
    %v1100 = vunpack.c.l.b16 %v815
    %v1101 = vunpack.c.h.b16 %v815
    %v1102 = vunpack.c.l.b16 %v816
    %v1103 = vunpack.c.h.b16 %v816
    %v1104 = vunpack.c.l.b16 %v817
    %v1105 = vunpack.c.h.b16 %v817
    %v1106 = vunpack.c.l.b16 %v818
    %v1107 = vunpack.c.h.b16 %v818
    %v1108 = vunpack.c.l.b16 %v819
    %v1109 = vunpack.c.h.b16 %v819
    %v1110 = vunpack.c.l.b16 %v820
    %v1111 = vunpack.c.h.b16 %v820
    %v1112 = vunpack.c.l.b16 %v821
    %v1113 = vunpack.c.h.b16 %v821
    %v1114 = vunpack.c.l.b16 %v822
    %v1115 = vunpack.c.h.b16 %v822
    %v1116 = vunpack.c.l.b16 %v823
    %v1117 = vunpack.c.h.b16 %v823
    %v1118 = vunpack.c.l.b16 %v824
    %v1119 = vunpack.c.h.b16 %v824
    %v1120 = vunpack.c.l.b16 %v825
    %v1121 = vunpack.c.h.b16 %v825
    %v1122 = vunpack.c.l.b16 %v826
    %v1123 = vunpack.c.h.b16 %v826
    %v1124 = vunpack.c.l.b16 %v827
    %v1125 = vunpack.c.h.b16 %v827
    %v1126 = vunpack.c.l.b16 %v828
    %v1127 = vunpack.c.h.b16 %v828
    %v1128 = vunpack.c.l.b16 %v829
    %v1129 = vunpack.c.h.b16 %v829
    %v1130 = vunpack.c.l.b16 %v830
    %v1131 = vunpack.c.h.b16 %v830
    %v1132 = vunpack.c.l.b16 %v831
    %v1133 = vunpack.c.h.b16 %v831
    %v1134 = vunpack.c.l.b16 %v832
    %v1135 = vunpack.c.h.b16 %v832
    %v1136 = vunpack.c.l.b16 %v833
    %v1137 = vunpack.c.h.b16 %v833
    %v1138 = vunpack.c.l.b16 %v834
    %v1139 = vunpack.c.h.b16 %v834
    %v1140 = vunpack.c.l.b16 %v835
    %v1141 = vunpack.c.h.b16 %v835
    %v1142 = vunpack.c.l.b16 %v836
    %v1143 = vunpack.c.h.b16 %v836
    %v1144 = vunpack.c.l.b16 %v837
    %v1145 = vunpack.c.h.b16 %v837
    %v1146 = vunpack.c.l.b16 %v838
    %v1147 = vunpack.c.h.b16 %v838
    %v1148 = vunpack.c.l.b16 %v839
    %v1149 = vunpack.c.h.b16 %v839
    %v1150 = vpack.c.b16 %v1090, %v1086
    %v1151 = vpack.c.b16 %v1091, %v1087
    %v1152 = vpack.c.b16 %v1092, %v1088
    %v1153 = vpack.c.b16 %v1093, %v1089
    %v1154 = vpack.c.b16 %v1098, %v1094
    %v1155 = vpack.c.b16 %v1099, %v1095
    %v1156 = vpack.c.b16 %v1100, %v1096
    %v1157 = vpack.c.b16 %v1101, %v1097
    %v1158 = vpack.c.b16 %v1106, %v1102
    %v1159 = vpack.c.b16 %v1107, %v1103
    %v1160 = vpack.c.b16 %v1108, %v1104
    %v1161 = vpack.c.b16 %v1109, %v1105
    %v1162 = vpack.c.b16 %v1114, %v1110
    %v1163 = vpack.c.b16 %v1115, %v1111
    %v1164 = vpack.c.b16 %v1116, %v1112
    %v1165 = vpack.c.b16 %v1117, %v1113
    %v1166 = vpack.c.b16 %v1122, %v1118
    %v1167 = vpack.c.b16 %v1123, %v1119
    %v1168 = vpack.c.b16 %v1124, %v1120
    %v1169 = vpack.c.b16 %v1125, %v1121
    %v1170 = vpack.c.b16 %v1130, %v1126
    %v1171 = vpack.c.b16 %v1131, %v1127
    %v1172 = vpack.c.b16 %v1132, %v1128
    %v1173 = vpack.c.b16 %v1133, %v1129
    %v1174 = vpack.c.b16 %v1138, %v1134
    %v1175 = vpack.c.b16 %v1139, %v1135
    %v1176 = vpack.c.b16 %v1140, %v1136
    %v1177 = vpack.c.b16 %v1141, %v1137
    %v1178 = vpack.c.b16 %v1146, %v1142
    %v1179 = vpack.c.b16 %v1147, %v1143
    %v1180 = vpack.c.b16 %v1148, %v1144
    %v1181 = vpack.c.b16 %v1149, %v1145
    %1214 = vmatpush.bf16.msra.mxu0 %v1178
    %1215 = vmatpush.bf16.msra.mxu0 %v1174
    %1216 = vmatpush.bf16.msra.mxu0 %v1170
    %1217 = vmatpush.bf16.msra.mxu0 %v1166
    %1218 = vmatpush.bf16.msra.mxu0 %v1162
    %1219 = vmatpush.bf16.msra.mxu0 %v1158
    %1220 = vmatpush.bf16.msra.mxu0 %v1154
    %1221 = vmatpush.bf16.msra.mxu0 %v1150
    %1222 = vmatmul.bf16.gmra.mxu0 %v1050
    %v1223 = vpop.f32.mrf.mxu0
    %v1224 = vadd.f32 0.0, %v1223
    %v1225 = vpop.f32.mrf.mxu0
    %v1226 = vadd.f32 0.0, %v1225
    %1227 = vmatmul.bf16.gmra.mxu0 %v1051
    %v1228 = vpop.f32.mrf.mxu0
    %v1229 = vadd.f32 0.0, %v1228
    %v1230 = vpop.f32.mrf.mxu0
    %v1231 = vadd.f32 0.0, %v1230
    %1232 = vmatmul.bf16.gmra.mxu0 %v1052
    %v1233 = vpop.f32.mrf.mxu0
    %v1234 = vadd.f32 0.0, %v1233
    %v1235 = vpop.f32.mrf.mxu0
    %v1236 = vadd.f32 0.0, %v1235
    %1237 = vmatmul.bf16.gmra.mxu0 %v1053
    %v1238 = vpop.f32.mrf.mxu0
    %v1239 = vadd.f32 0.0, %v1238
    %v1240 = vpop.f32.mrf.mxu0
    %v1241 = vadd.f32 0.0, %v1240
    %1242 = vdwg.mxu0
    %1243 = vmatpush.bf16.msra.mxu0 %v1179
    %1244 = vmatpush.bf16.msra.mxu0 %v1175
    %1245 = vmatpush.bf16.msra.mxu0 %v1171
    %1246 = vmatpush.bf16.msra.mxu0 %v1167
    %1247 = vmatpush.bf16.msra.mxu0 %v1163
    %1248 = vmatpush.bf16.msra.mxu0 %v1159
    %1249 = vmatpush.bf16.msra.mxu0 %v1155
    %1250 = vmatpush.bf16.msra.mxu0 %v1151
    %1251 = vmatmul.bf16.gmra.mxu0 %v1050
    %v1252 = vpop.f32.mrf.mxu0
    %v1253 = vadd.f32 0.0, %v1252
    %v1254 = vpop.f32.mrf.mxu0
    %v1255 = vadd.f32 0.0, %v1254
    %1256 = vmatmul.bf16.gmra.mxu0 %v1051
    %v1257 = vpop.f32.mrf.mxu0
    %v1258 = vadd.f32 0.0, %v1257
    %v1259 = vpop.f32.mrf.mxu0
    %v1260 = vadd.f32 0.0, %v1259
    %1261 = vmatmul.bf16.gmra.mxu0 %v1052
    %v1262 = vpop.f32.mrf.mxu0
    %v1263 = vadd.f32 0.0, %v1262
    %v1264 = vpop.f32.mrf.mxu0
    %v1265 = vadd.f32 0.0, %v1264
    %1266 = vmatmul.bf16.gmra.mxu0 %v1053
    %v1267 = vpop.f32.mrf.mxu0
    %v1268 = vadd.f32 0.0, %v1267
    %v1269 = vpop.f32.mrf.mxu0
    %v1270 = vadd.f32 0.0, %v1269
    %1271 = vdwg.mxu0
    %1272 = vmatpush.bf16.msra.mxu0 %v1180
    %1273 = vmatpush.bf16.msra.mxu0 %v1176
    %1274 = vmatpush.bf16.msra.mxu0 %v1172
    %1275 = vmatpush.bf16.msra.mxu0 %v1168
    %1276 = vmatpush.bf16.msra.mxu0 %v1164
    %1277 = vmatpush.bf16.msra.mxu0 %v1160
    %1278 = vmatpush.bf16.msra.mxu0 %v1156
    %1279 = vmatpush.bf16.msra.mxu0 %v1152
    %1280 = vmatmul.bf16.gmra.mxu0 %v1050
    %v1281 = vpop.f32.mrf.mxu0
    %v1282 = vadd.f32 0.0, %v1281
    %v1283 = vpop.f32.mrf.mxu0
    %v1284 = vadd.f32 0.0, %v1283
    %1285 = vmatmul.bf16.gmra.mxu0 %v1051
    %v1286 = vpop.f32.mrf.mxu0
    %v1287 = vadd.f32 0.0, %v1286
    %v1288 = vpop.f32.mrf.mxu0
    %v1289 = vadd.f32 0.0, %v1288
    %1290 = vmatmul.bf16.gmra.mxu0 %v1052
    %v1291 = vpop.f32.mrf.mxu0
    %v1292 = vadd.f32 0.0, %v1291
    %v1293 = vpop.f32.mrf.mxu0
    %v1294 = vadd.f32 0.0, %v1293
    %1295 = vmatmul.bf16.gmra.mxu0 %v1053
    %v1296 = vpop.f32.mrf.mxu0
    %v1297 = vadd.f32 0.0, %v1296
    %v1298 = vpop.f32.mrf.mxu0
    %v1299 = vadd.f32 0.0, %v1298
    %1300 = vdwg.mxu0
    %1301 = vmatpush.bf16.msra.mxu0 %v1181
    %1302 = vmatpush.bf16.msra.mxu0 %v1177
    %1303 = vmatpush.bf16.msra.mxu0 %v1173
    %1304 = vmatpush.bf16.msra.mxu0 %v1169
    %1305 = vmatpush.bf16.msra.mxu0 %v1165
    %1306 = vmatpush.bf16.msra.mxu0 %v1161
    %1307 = vmatpush.bf16.msra.mxu0 %v1157
    %1308 = vmatpush.bf16.msra.mxu0 %v1153
    %1309 = vmatmul.bf16.gmra.mxu0 %v1050
    %v1310 = vpop.f32.mrf.mxu0
    %v1311 = vadd.f32 0.0, %v1310
    %v1312 = vpop.f32.mrf.mxu0
    %v1313 = vadd.f32 0.0, %v1312
    %1314 = vmatmul.bf16.gmra.mxu0 %v1051
    %v1315 = vpop.f32.mrf.mxu0
    %v1316 = vadd.f32 0.0, %v1315
    %v1317 = vpop.f32.mrf.mxu0
    %v1318 = vadd.f32 0.0, %v1317
    %1319 = vmatmul.bf16.gmra.mxu0 %v1052
    %v1320 = vpop.f32.mrf.mxu0
    %v1321 = vadd.f32 0.0, %v1320
    %v1322 = vpop.f32.mrf.mxu0
    %v1323 = vadd.f32 0.0, %v1322
    %1324 = vmatmul.bf16.gmra.mxu0 %v1053
    %v1325 = vpop.f32.mrf.mxu0
    %v1326 = vadd.f32 0.0, %v1325
    %v1327 = vpop.f32.mrf.mxu0
    %v1328 = vadd.f32 0.0, %v1327
    %1329 = vdwg.mxu0
    %v1330 = vxor.u32 %v1224, 2147483648
    %v1331 = vxor.u32 %v1253, 2147483648
    %v1332 = vxor.u32 %v1226, 2147483648
    %v1333 = vxor.u32 %v1255, 2147483648
    %v1334 = vxor.u32 %v1229, 2147483648
    %v1335 = vxor.u32 %v1258, 2147483648
    %v1336 = vxor.u32 %v1231, 2147483648
    %v1337 = vxor.u32 %v1260, 2147483648
    %v1338 = vxor.u32 %v1234, 2147483648
    %v1339 = vxor.u32 %v1263, 2147483648
    %v1340 = vxor.u32 %v1236, 2147483648
    %v1341 = vxor.u32 %v1265, 2147483648
    %v1342 = vxor.u32 %v1239, 2147483648
    %v1343 = vxor.u32 %v1268, 2147483648
    %v1344 = vxor.u32 %v1241, 2147483648
    %v1345 = vxor.u32 %v1270, 2147483648
    %v1346 = vmul.f32 %v1330, 1.442695
    %v1347 = vpow.pop %v1346
    %v1348 = vmul.f32 %v1331, 1.442695
    %v1349 = vpow.pop %v1348
    %v1350 = vmul.f32 %v1332, 1.442695
    %v1351 = vpow.pop %v1350
    %v1352 = vmul.f32 %v1333, 1.442695
    %v1353 = vpow.pop %v1352
    %v1354 = vmul.f32 %v1334, 1.442695
    %v1355 = vpow.pop %v1354
    %v1356 = vmul.f32 %v1335, 1.442695
    %v1357 = vpow.pop %v1356
    %v1358 = vmul.f32 %v1336, 1.442695
    %v1359 = vpow.pop %v1358
    %v1360 = vmul.f32 %v1337, 1.442695
    %v1361 = vpow.pop %v1360
    %v1362 = vmul.f32 %v1338, 1.442695
    %v1363 = vpow.pop %v1362
    %v1364 = vmul.f32 %v1339, 1.442695
    %v1365 = vpow.pop %v1364
    %v1366 = vmul.f32 %v1340, 1.442695
    %v1367 = vpow.pop %v1366
    %v1368 = vmul.f32 %v1341, 1.442695
    %v1369 = vpow.pop %v1368
    %v1370 = vmul.f32 %v1342, 1.442695
    %v1371 = vpow.pop %v1370
    %v1372 = vmul.f32 %v1343, 1.442695
    %v1373 = vpow.pop %v1372
    %v1374 = vmul.f32 %v1344, 1.442695
    %v1375 = vpow.pop %v1374
    %v1376 = vmul.f32 %v1345, 1.442695
    %v1377 = vpow.pop %v1376
    %v1378 = vadd.f32 %v1347, 1.0
    %v1379 = vadd.f32 %v1349, 1.0
    %v1380 = vadd.f32 %v1351, 1.0
    %v1381 = vadd.f32 %v1353, 1.0
    %v1382 = vadd.f32 %v1355, 1.0
    %v1383 = vadd.f32 %v1357, 1.0
    %v1384 = vadd.f32 %v1359, 1.0
    %v1385 = vadd.f32 %v1361, 1.0
    %v1386 = vadd.f32 %v1363, 1.0
    %v1387 = vadd.f32 %v1365, 1.0
    %v1388 = vadd.f32 %v1367, 1.0
    %v1389 = vadd.f32 %v1369, 1.0
    %v1390 = vadd.f32 %v1371, 1.0
    %v1391 = vadd.f32 %v1373, 1.0
    %v1392 = vadd.f32 %v1375, 1.0
    %v1393 = vadd.f32 %v1377, 1.0
    %v1394 = vrcp.pop %v1378
    %v1395 = vmul.f32 %v1378, %v1394
    %v1396 = vsub.f32 1.0, %v1395
    %v1397 = vmul.f32 %v1394, %v1396
    %v1398 = vadd.f32 %v1394, %v1397
    %vm1399 = vweird.f32 %v1378
    %vm1400 = vweird.f32 %v1394
    %vm1401 = vmor %vm1399, %vm1400
    %v1402 = vsel %vm1401, %v1394, %v1398
    %v1403 = vand.u32 2147483647, %v1378
    %vm1404 = vcmp.eq.f32.partialorder %v1403, 8.507059e+37
    %v1405 = vand.u32 %v1378, 2147483648
    %v1406 = vor.u32 1.1754944e-38, %v1405
    %v1407 = vsel %vm1404, %v1406, %v1402
    %v1408 = vmul.f32 1.0, %v1407
    %v1409 = vrcp.pop %v1379
    %v1410 = vmul.f32 %v1379, %v1409
    %v1411 = vsub.f32 1.0, %v1410
    %v1412 = vmul.f32 %v1409, %v1411
    %v1413 = vadd.f32 %v1409, %v1412
    %vm1414 = vweird.f32 %v1379
    %vm1415 = vweird.f32 %v1409
    %vm1416 = vmor %vm1414, %vm1415
    %v1417 = vsel %vm1416, %v1409, %v1413
    %v1418 = vand.u32 2147483647, %v1379
    %vm1419 = vcmp.eq.f32.partialorder %v1418, 8.507059e+37
    %v1420 = vand.u32 %v1379, 2147483648
    %v1421 = vor.u32 1.1754944e-38, %v1420
    %v1422 = vsel %vm1419, %v1421, %v1417
    %v1423 = vmul.f32 1.0, %v1422
    %v1424 = vrcp.pop %v1380
    %v1425 = vmul.f32 %v1380, %v1424
    %v1426 = vsub.f32 1.0, %v1425
    %v1427 = vmul.f32 %v1424, %v1426
    %v1428 = vadd.f32 %v1424, %v1427
    %vm1429 = vweird.f32 %v1380
    %vm1430 = vweird.f32 %v1424
    %vm1431 = vmor %vm1429, %vm1430
    %v1432 = vsel %vm1431, %v1424, %v1428
    %v1433 = vand.u32 2147483647, %v1380
    %vm1434 = vcmp.eq.f32.partialorder %v1433, 8.507059e+37
    %v1435 = vand.u32 %v1380, 2147483648
    %v1436 = vor.u32 1.1754944e-38, %v1435
    %v1437 = vsel %vm1434, %v1436, %v1432
    %v1438 = vmul.f32 1.0, %v1437
    %v1439 = vrcp.pop %v1381
    %v1440 = vmul.f32 %v1381, %v1439
    %v1441 = vsub.f32 1.0, %v1440
    %v1442 = vmul.f32 %v1439, %v1441
    %v1443 = vadd.f32 %v1439, %v1442
    %vm1444 = vweird.f32 %v1381
    %vm1445 = vweird.f32 %v1439
    %vm1446 = vmor %vm1444, %vm1445
    %v1447 = vsel %vm1446, %v1439, %v1443
    %v1448 = vand.u32 2147483647, %v1381
    %vm1449 = vcmp.eq.f32.partialorder %v1448, 8.507059e+37
    %v1450 = vand.u32 %v1381, 2147483648
    %v1451 = vor.u32 1.1754944e-38, %v1450
    %v1452 = vsel %vm1449, %v1451, %v1447
    %v1453 = vmul.f32 1.0, %v1452
    %v1454 = vrcp.pop %v1382
    %v1455 = vmul.f32 %v1382, %v1454
    %v1456 = vsub.f32 1.0, %v1455
    %v1457 = vmul.f32 %v1454, %v1456
    %v1458 = vadd.f32 %v1454, %v1457
    %vm1459 = vweird.f32 %v1382
    %vm1460 = vweird.f32 %v1454
    %vm1461 = vmor %vm1459, %vm1460
    %v1462 = vsel %vm1461, %v1454, %v1458
    %v1463 = vand.u32 2147483647, %v1382
    %vm1464 = vcmp.eq.f32.partialorder %v1463, 8.507059e+37
    %v1465 = vand.u32 %v1382, 2147483648
    %v1466 = vor.u32 1.1754944e-38, %v1465
    %v1467 = vsel %vm1464, %v1466, %v1462
    %v1468 = vmul.f32 1.0, %v1467
    %v1469 = vrcp.pop %v1383
    %v1470 = vmul.f32 %v1383, %v1469
    %v1471 = vsub.f32 1.0, %v1470
    %v1472 = vmul.f32 %v1469, %v1471
    %v1473 = vadd.f32 %v1469, %v1472
    %vm1474 = vweird.f32 %v1383
    %vm1475 = vweird.f32 %v1469
    %vm1476 = vmor %vm1474, %vm1475
    %v1477 = vsel %vm1476, %v1469, %v1473
    %v1478 = vand.u32 2147483647, %v1383
    %vm1479 = vcmp.eq.f32.partialorder %v1478, 8.507059e+37
    %v1480 = vand.u32 %v1383, 2147483648
    %v1481 = vor.u32 1.1754944e-38, %v1480
    %v1482 = vsel %vm1479, %v1481, %v1477
    %v1483 = vmul.f32 1.0, %v1482
    %v1484 = vrcp.pop %v1384
    %v1485 = vmul.f32 %v1384, %v1484
    %v1486 = vsub.f32 1.0, %v1485
    %v1487 = vmul.f32 %v1484, %v1486
    %v1488 = vadd.f32 %v1484, %v1487
    %vm1489 = vweird.f32 %v1384
    %vm1490 = vweird.f32 %v1484
    %vm1491 = vmor %vm1489, %vm1490
    %v1492 = vsel %vm1491, %v1484, %v1488
    %v1493 = vand.u32 2147483647, %v1384
    %vm1494 = vcmp.eq.f32.partialorder %v1493, 8.507059e+37
    %v1495 = vand.u32 %v1384, 2147483648
    %v1496 = vor.u32 1.1754944e-38, %v1495
    %v1497 = vsel %vm1494, %v1496, %v1492
    %v1498 = vmul.f32 1.0, %v1497
    %v1499 = vrcp.pop %v1385
    %v1500 = vmul.f32 %v1385, %v1499
    %v1501 = vsub.f32 1.0, %v1500
    %v1502 = vmul.f32 %v1499, %v1501
    %v1503 = vadd.f32 %v1499, %v1502
    %vm1504 = vweird.f32 %v1385
    %vm1505 = vweird.f32 %v1499
    %vm1506 = vmor %vm1504, %vm1505
    %v1507 = vsel %vm1506, %v1499, %v1503
    %v1508 = vand.u32 2147483647, %v1385
    %vm1509 = vcmp.eq.f32.partialorder %v1508, 8.507059e+37
    %v1510 = vand.u32 %v1385, 2147483648
    %v1511 = vor.u32 1.1754944e-38, %v1510
    %v1512 = vsel %vm1509, %v1511, %v1507
    %v1513 = vmul.f32 1.0, %v1512
    %v1514 = vrcp.pop %v1386
    %v1515 = vmul.f32 %v1386, %v1514
    %v1516 = vsub.f32 1.0, %v1515
    %v1517 = vmul.f32 %v1514, %v1516
    %v1518 = vadd.f32 %v1514, %v1517
    %vm1519 = vweird.f32 %v1386
    %vm1520 = vweird.f32 %v1514
    %vm1521 = vmor %vm1519, %vm1520
    %v1522 = vsel %vm1521, %v1514, %v1518
    %v1523 = vand.u32 2147483647, %v1386
    %vm1524 = vcmp.eq.f32.partialorder %v1523, 8.507059e+37
    %v1525 = vand.u32 %v1386, 2147483648
    %v1526 = vor.u32 1.1754944e-38, %v1525
    %v1527 = vsel %vm1524, %v1526, %v1522
    %v1528 = vmul.f32 1.0, %v1527
    %v1529 = vrcp.pop %v1387
    %v1530 = vmul.f32 %v1387, %v1529
    %v1531 = vsub.f32 1.0, %v1530
    %v1532 = vmul.f32 %v1529, %v1531
    %v1533 = vadd.f32 %v1529, %v1532
    %vm1534 = vweird.f32 %v1387
    %vm1535 = vweird.f32 %v1529
    %vm1536 = vmor %vm1534, %vm1535
    %v1537 = vsel %vm1536, %v1529, %v1533
    %v1538 = vand.u32 2147483647, %v1387
    %vm1539 = vcmp.eq.f32.partialorder %v1538, 8.507059e+37
    %v1540 = vand.u32 %v1387, 2147483648
    %v1541 = vor.u32 1.1754944e-38, %v1540
    %v1542 = vsel %vm1539, %v1541, %v1537
    %v1543 = vmul.f32 1.0, %v1542
    %v1544 = vrcp.pop %v1388
    %v1545 = vmul.f32 %v1388, %v1544
    %v1546 = vsub.f32 1.0, %v1545
    %v1547 = vmul.f32 %v1544, %v1546
    %v1548 = vadd.f32 %v1544, %v1547
    %vm1549 = vweird.f32 %v1388
    %vm1550 = vweird.f32 %v1544
    %vm1551 = vmor %vm1549, %vm1550
    %v1552 = vsel %vm1551, %v1544, %v1548
    %v1553 = vand.u32 2147483647, %v1388
    %vm1554 = vcmp.eq.f32.partialorder %v1553, 8.507059e+37
    %v1555 = vand.u32 %v1388, 2147483648
    %v1556 = vor.u32 1.1754944e-38, %v1555
    %v1557 = vsel %vm1554, %v1556, %v1552
    %v1558 = vmul.f32 1.0, %v1557
    %v1559 = vrcp.pop %v1389
    %v1560 = vmul.f32 %v1389, %v1559
    %v1561 = vsub.f32 1.0, %v1560
    %v1562 = vmul.f32 %v1559, %v1561
    %v1563 = vadd.f32 %v1559, %v1562
    %vm1564 = vweird.f32 %v1389
    %vm1565 = vweird.f32 %v1559
    %vm1566 = vmor %vm1564, %vm1565
    %v1567 = vsel %vm1566, %v1559, %v1563
    %v1568 = vand.u32 2147483647, %v1389
    %vm1569 = vcmp.eq.f32.partialorder %v1568, 8.507059e+37
    %v1570 = vand.u32 %v1389, 2147483648
    %v1571 = vor.u32 1.1754944e-38, %v1570
    %v1572 = vsel %vm1569, %v1571, %v1567
    %v1573 = vmul.f32 1.0, %v1572
    %v1574 = vrcp.pop %v1390
    %v1575 = vmul.f32 %v1390, %v1574
    %v1576 = vsub.f32 1.0, %v1575
    %v1577 = vmul.f32 %v1574, %v1576
    %v1578 = vadd.f32 %v1574, %v1577
    %vm1579 = vweird.f32 %v1390
    %vm1580 = vweird.f32 %v1574
    %vm1581 = vmor %vm1579, %vm1580
    %v1582 = vsel %vm1581, %v1574, %v1578
    %v1583 = vand.u32 2147483647, %v1390
    %vm1584 = vcmp.eq.f32.partialorder %v1583, 8.507059e+37
    %v1585 = vand.u32 %v1390, 2147483648
    %v1586 = vor.u32 1.1754944e-38, %v1585
    %v1587 = vsel %vm1584, %v1586, %v1582
    %v1588 = vmul.f32 1.0, %v1587
    %v1589 = vrcp.pop %v1391
    %v1590 = vmul.f32 %v1391, %v1589
    %v1591 = vsub.f32 1.0, %v1590
    %v1592 = vmul.f32 %v1589, %v1591
    %v1593 = vadd.f32 %v1589, %v1592
    %vm1594 = vweird.f32 %v1391
    %vm1595 = vweird.f32 %v1589
    %vm1596 = vmor %vm1594, %vm1595
    %v1597 = vsel %vm1596, %v1589, %v1593
    %v1598 = vand.u32 2147483647, %v1391
    %vm1599 = vcmp.eq.f32.partialorder %v1598, 8.507059e+37
    %v1600 = vand.u32 %v1391, 2147483648
    %v1601 = vor.u32 1.1754944e-38, %v1600
    %v1602 = vsel %vm1599, %v1601, %v1597
    %v1603 = vmul.f32 1.0, %v1602
    %v1604 = vrcp.pop %v1392
    %v1605 = vmul.f32 %v1392, %v1604
    %v1606 = vsub.f32 1.0, %v1605
    %v1607 = vmul.f32 %v1604, %v1606
    %v1608 = vadd.f32 %v1604, %v1607
    %vm1609 = vweird.f32 %v1392
    %vm1610 = vweird.f32 %v1604
    %vm1611 = vmor %vm1609, %vm1610
    %v1612 = vsel %vm1611, %v1604, %v1608
    %v1613 = vand.u32 2147483647, %v1392
    %vm1614 = vcmp.eq.f32.partialorder %v1613, 8.507059e+37
    %v1615 = vand.u32 %v1392, 2147483648
    %v1616 = vor.u32 1.1754944e-38, %v1615
    %v1617 = vsel %vm1614, %v1616, %v1612
    %v1618 = vmul.f32 1.0, %v1617
    %v1619 = vrcp.pop %v1393
    %v1620 = vmul.f32 %v1393, %v1619
    %v1621 = vsub.f32 1.0, %v1620
    %v1622 = vmul.f32 %v1619, %v1621
    %v1623 = vadd.f32 %v1619, %v1622
    %vm1624 = vweird.f32 %v1393
    %vm1625 = vweird.f32 %v1619
    %vm1626 = vmor %vm1624, %vm1625
    %v1627 = vsel %vm1626, %v1619, %v1623
    %v1628 = vand.u32 2147483647, %v1393
    %vm1629 = vcmp.eq.f32.partialorder %v1628, 8.507059e+37
    %v1630 = vand.u32 %v1393, 2147483648
    %v1631 = vor.u32 1.1754944e-38, %v1630
    %v1632 = vsel %vm1629, %v1631, %v1627
    %v1633 = vmul.f32 1.0, %v1632
    %v1634 = vmul.f32 %v1224, %v1408
    %v1635 = vmul.f32 %v1253, %v1423
    %v1636 = vmul.f32 %v1226, %v1438
    %v1637 = vmul.f32 %v1255, %v1453
    %v1638 = vmul.f32 %v1229, %v1468
    %v1639 = vmul.f32 %v1258, %v1483
    %v1640 = vmul.f32 %v1231, %v1498
    %v1641 = vmul.f32 %v1260, %v1513
    %v1642 = vmul.f32 %v1234, %v1528
    %v1643 = vmul.f32 %v1263, %v1543
    %v1644 = vmul.f32 %v1236, %v1558
    %v1645 = vmul.f32 %v1265, %v1573
    %v1646 = vmul.f32 %v1239, %v1588
    %v1647 = vmul.f32 %v1268, %v1603
    %v1648 = vmul.f32 %v1241, %v1618
    %v1649 = vmul.f32 %v1270, %v1633
    %v1650 = vmul.f32 %v1634, %v1282
    %v1651 = vmul.f32 %v1635, %v1311
    %v1652 = vmul.f32 %v1636, %v1284
    %v1653 = vmul.f32 %v1637, %v1313
    %v1654 = vmul.f32 %v1638, %v1287
    %v1655 = vmul.f32 %v1639, %v1316
    %v1656 = vmul.f32 %v1640, %v1289
    %v1657 = vmul.f32 %v1641, %v1318
    %v1658 = vmul.f32 %v1642, %v1292
    %v1659 = vmul.f32 %v1643, %v1321
    %v1660 = vmul.f32 %v1644, %v1294
    %v1661 = vmul.f32 %v1645, %v1323
    %v1662 = vmul.f32 %v1646, %v1297
    %v1663 = vmul.f32 %v1647, %v1326
    %v1664 = vmul.f32 %v1648, %v1299
    %v1665 = vmul.f32 %v1649, %v1328
    %v1666 = vpack.c.bf16 %v1652, %v1650
    %v1667 = vpack.c.bf16 %v1653, %v1651
    %v1668 = vpack.c.bf16 %v1656, %v1654
    %v1669 = vpack.c.bf16 %v1657, %v1655
    %v1670 = vpack.c.bf16 %v1660, %v1658
    %v1671 = vpack.c.bf16 %v1661, %v1659
    %v1672 = vpack.c.bf16 %v1664, %v1662
    %v1673 = vpack.c.bf16 %v1665, %v1663
    %v1706 = vunpack.c.l.b16 %v840
    %v1707 = vunpack.c.l.b16 %v841
    %v1708 = vunpack.c.l.b16 %v842
    %v1709 = vunpack.c.l.b16 %v843
    %v1710 = vunpack.c.l.b16 %v844
    %v1711 = vunpack.c.l.b16 %v845
    %v1712 = vunpack.c.l.b16 %v846
    %v1713 = vunpack.c.l.b16 %v847
    %v1714 = vunpack.c.l.b16 %v848
    %v1715 = vunpack.c.l.b16 %v849
    %v1716 = vunpack.c.l.b16 %v850
    %v1717 = vunpack.c.l.b16 %v851
    %v1718 = vunpack.c.l.b16 %v852
    %v1719 = vunpack.c.l.b16 %v853
    %v1720 = vunpack.c.l.b16 %v854
    %v1721 = vunpack.c.l.b16 %v855
    %v1722 = vunpack.c.l.b16 %v856
    %v1723 = vunpack.c.l.b16 %v857
    %v1724 = vunpack.c.l.b16 %v858
    %v1725 = vunpack.c.l.b16 %v859
    %v1726 = vunpack.c.l.b16 %v860
    %v1727 = vunpack.c.l.b16 %v861
    %v1728 = vunpack.c.l.b16 %v862
    %v1729 = vunpack.c.l.b16 %v863
    %v1730 = vunpack.c.l.b16 %v864
    %v1731 = vunpack.c.l.b16 %v865
    %v1732 = vunpack.c.l.b16 %v866
    %v1733 = vunpack.c.l.b16 %v867
    %v1734 = vunpack.c.l.b16 %v868
    %v1735 = vunpack.c.l.b16 %v869
    %v1736 = vunpack.c.l.b16 %v870
    %v1737 = vunpack.c.l.b16 %v871
    %v1738 = vpack.c.b16 %v1707, %v1706
    %v1739 = vpack.c.b16 %v1709, %v1708
    %v1740 = vpack.c.b16 %v1711, %v1710
    %v1741 = vpack.c.b16 %v1713, %v1712
    %v1742 = vpack.c.b16 %v1715, %v1714
    %v1743 = vpack.c.b16 %v1717, %v1716
    %v1744 = vpack.c.b16 %v1719, %v1718
    %v1745 = vpack.c.b16 %v1721, %v1720
    %v1746 = vpack.c.b16 %v1723, %v1722
    %v1747 = vpack.c.b16 %v1725, %v1724
    %v1748 = vpack.c.b16 %v1727, %v1726
    %v1749 = vpack.c.b16 %v1729, %v1728
    %v1750 = vpack.c.b16 %v1731, %v1730
    %v1751 = vpack.c.b16 %v1733, %v1732
    %v1752 = vpack.c.b16 %v1735, %v1734
    %v1753 = vpack.c.b16 %v1737, %v1736
    %1770 = vmatpush.bf16.msra.mxu0 %v1745
    %1771 = vmatpush.bf16.msra.mxu0 %v1744
    %1772 = vmatpush.bf16.msra.mxu0 %v1743
    %1773 = vmatpush.bf16.msra.mxu0 %v1742
    %1774 = vmatpush.bf16.msra.mxu0 %v1741
    %1775 = vmatpush.bf16.msra.mxu0 %v1740
    %1776 = vmatpush.bf16.msra.mxu0 %v1739
    %1777 = vmatpush.bf16.msra.mxu0 %v1738
    %1778 = vmatmul.bf16.gmra.mxu0 %v1666
    %v1779 = vpop.f32.mrf.mxu0
    %v1780 = vadd.f32 0.0, %v1779
    %v1781 = vpop.f32.mrf.mxu0
    %v1782 = vadd.f32 0.0, %v1781
    %1783 = vmatmul.bf16.gmra.mxu0 %v1668
    %v1784 = vpop.f32.mrf.mxu0
    %v1785 = vadd.f32 0.0, %v1784
    %v1786 = vpop.f32.mrf.mxu0
    %v1787 = vadd.f32 0.0, %v1786
    %1788 = vmatmul.bf16.gmra.mxu0 %v1670
    %v1789 = vpop.f32.mrf.mxu0
    %v1790 = vadd.f32 0.0, %v1789
    %v1791 = vpop.f32.mrf.mxu0
    %v1792 = vadd.f32 0.0, %v1791
    %1793 = vmatmul.bf16.gmra.mxu0 %v1672
    %v1794 = vpop.f32.mrf.mxu0
    %v1795 = vadd.f32 0.0, %v1794
    %v1796 = vpop.f32.mrf.mxu0
    %v1797 = vadd.f32 0.0, %v1796
    %1798 = vdwg.mxu0
    %1799 = vmatpush.bf16.msra.mxu0 %v1753
    %1800 = vmatpush.bf16.msra.mxu0 %v1752
    %1801 = vmatpush.bf16.msra.mxu0 %v1751
    %1802 = vmatpush.bf16.msra.mxu0 %v1750
    %1803 = vmatpush.bf16.msra.mxu0 %v1749
    %1804 = vmatpush.bf16.msra.mxu0 %v1748
    %1805 = vmatpush.bf16.msra.mxu0 %v1747
    %1806 = vmatpush.bf16.msra.mxu0 %v1746
    %1807 = vmatmul.bf16.gmra.mxu0 %v1667
    %v1808 = vpop.f32.mrf.mxu0
    %v1809 = vadd.f32 %v1780, %v1808
    %v1810 = vpop.f32.mrf.mxu0
    %v1811 = vadd.f32 %v1782, %v1810
    %1812 = vmatmul.bf16.gmra.mxu0 %v1669
    %v1813 = vpop.f32.mrf.mxu0
    %v1814 = vadd.f32 %v1785, %v1813
    %v1815 = vpop.f32.mrf.mxu0
    %v1816 = vadd.f32 %v1787, %v1815
    %1817 = vmatmul.bf16.gmra.mxu0 %v1671
    %v1818 = vpop.f32.mrf.mxu0
    %v1819 = vadd.f32 %v1790, %v1818
    %v1820 = vpop.f32.mrf.mxu0
    %v1821 = vadd.f32 %v1792, %v1820
    %1822 = vmatmul.bf16.gmra.mxu0 %v1673
    %v1823 = vpop.f32.mrf.mxu0
    %v1824 = vadd.f32 %v1795, %v1823
    %v1825 = vpop.f32.mrf.mxu0
    %v1826 = vadd.f32 %v1797, %v1825
    %1827 = vdwg.mxu0
    %v1828 = vadd.f32 %v788, %v1809
    %v1829 = vadd.f32 %v790, %v1811
    %v1830 = vadd.f32 %v793, %v1814
    %v1831 = vadd.f32 %v795, %v1816
    %v1832 = vadd.f32 %v798, %v1819
    %v1833 = vadd.f32 %v800, %v1821
    %v1834 = vadd.f32 %v803, %v1824
    %v1835 = vadd.f32 %v805, %v1826
    %v1836 = vld [vmem:[%s7] sm:$0x1]
    %v1837 = vld [vmem:[#allocation13] sm:$0xff]
    %v1838 = vld [vmem:[#allocation13 + $0x8] sm:$0xff]
    %v1839 = vld [vmem:[#allocation13 + $0x10] sm:$0xff]
    %v1840 = vld [vmem:[#allocation13 + $0x18] sm:$0xff]
    %v1841 = vld [vmem:[#allocation13 + $0x20] sm:$0xff]
    %v1842 = vld [vmem:[#allocation13 + $0x28] sm:$0xff]
    %v1843 = vld [vmem:[#allocation13 + $0x30] sm:$0xff]
    %v1844 = vld [vmem:[#allocation13 + $0x38] sm:$0xff]
    %v1845 = vld [vmem:[#allocation13 + $0x40] sm:$0xff]
    %v1846 = vld [vmem:[#allocation13 + $0x48] sm:$0xff]
    %v1847 = vld [vmem:[#allocation13 + $0x50] sm:$0xff]
    %v1848 = vld [vmem:[#allocation13 + $0x58] sm:$0xff]
    %v1849 = vld [vmem:[#allocation13 + $0x60] sm:$0xff]
    %v1850 = vld [vmem:[#allocation13 + $0x68] sm:$0xff]
    %v1851 = vld [vmem:[#allocation13 + $0x70] sm:$0xff]
    %v1852 = vld [vmem:[#allocation13 + $0x78] sm:$0xff]
    %v1853 = vld [vmem:[#allocation13 + $0x80] sm:$0xff]
    %v1854 = vld [vmem:[#allocation13 + $0x88] sm:$0xff]
    %v1855 = vld [vmem:[#allocation13 + $0x90] sm:$0xff]
    %v1856 = vld [vmem:[#allocation13 + $0x98] sm:$0xff]
    %v1857 = vld [vmem:[#allocation13 + $0xa0] sm:$0xff]
    %v1858 = vld [vmem:[#allocation13 + $0xa8] sm:$0xff]
    %v1859 = vld [vmem:[#allocation13 + $0xb0] sm:$0xff]
    %v1860 = vld [vmem:[#allocation13 + $0xb8] sm:$0xff]
    %v1861 = vld [vmem:[#allocation13 + $0xc0] sm:$0xff]
    %v1862 = vld [vmem:[#allocation13 + $0xc8] sm:$0xff]
    %v1863 = vld [vmem:[#allocation13 + $0xd0] sm:$0xff]
    %v1864 = vld [vmem:[#allocation13 + $0xd8] sm:$0xff]
    %v1865 = vld [vmem:[#allocation13 + $0xe0] sm:$0xff]
    %v1866 = vld [vmem:[#allocation13 + $0xe8] sm:$0xff]
    %v1867 = vld [vmem:[#allocation13 + $0xf0] sm:$0xff]
    %v1868 = vld [vmem:[#allocation13 + $0xf8] sm:$0xff]
    %v1869 = vld [vmem:[#allocation14] sm:$0xf]
    %v1870 = vld [vmem:[#allocation14 + $0x4] sm:$0xf]
    %v1871 = vld [vmem:[#allocation14 + $0x8] sm:$0xf]
    %v1872 = vld [vmem:[#allocation14 + $0xc] sm:$0xf]
    %v1873 = vld [vmem:[#allocation14 + $0x10] sm:$0xf]
    %v1874 = vld [vmem:[#allocation14 + $0x14] sm:$0xf]
    %v1875 = vld [vmem:[#allocation14 + $0x18] sm:$0xf]
    %v1876 = vld [vmem:[#allocation14 + $0x1c] sm:$0xf]
    %v1877 = vld [vmem:[#allocation14 + $0x20] sm:$0xf]
    %v1878 = vld [vmem:[#allocation14 + $0x24] sm:$0xf]
    %v1879 = vld [vmem:[#allocation14 + $0x28] sm:$0xf]
    %v1880 = vld [vmem:[#allocation14 + $0x2c] sm:$0xf]
    %v1881 = vld [vmem:[#allocation14 + $0x30] sm:$0xf]
    %v1882 = vld [vmem:[#allocation14 + $0x34] sm:$0xf]
    %v1883 = vld [vmem:[#allocation14 + $0x38] sm:$0xf]
    %v1884 = vld [vmem:[#allocation14 + $0x3c] sm:$0xf]
    %v1885 = vld [vmem:[#allocation14 + $0x40] sm:$0xf]
    %v1886 = vld [vmem:[#allocation14 + $0x44] sm:$0xf]
    %v1887 = vld [vmem:[#allocation14 + $0x48] sm:$0xf]
    %v1888 = vld [vmem:[#allocation14 + $0x4c] sm:$0xf]
    %v1889 = vld [vmem:[#allocation14 + $0x50] sm:$0xf]
    %v1890 = vld [vmem:[#allocation14 + $0x54] sm:$0xf]
    %v1891 = vld [vmem:[#allocation14 + $0x58] sm:$0xf]
    %v1892 = vld [vmem:[#allocation14 + $0x5c] sm:$0xf]
    %v1893 = vld [vmem:[#allocation14 + $0x60] sm:$0xf]
    %v1894 = vld [vmem:[#allocation14 + $0x64] sm:$0xf]
    %v1895 = vld [vmem:[#allocation14 + $0x68] sm:$0xf]
    %v1896 = vld [vmem:[#allocation14 + $0x6c] sm:$0xf]
    %v1897 = vld [vmem:[#allocation14 + $0x70] sm:$0xf]
    %v1898 = vld [vmem:[#allocation14 + $0x74] sm:$0xf]
    %v1899 = vld [vmem:[#allocation14 + $0x78] sm:$0xf]
    %v1900 = vld [vmem:[#allocation14 + $0x7c] sm:$0xf]
    %1901 = vadd.xlane.f32.xlu0 %v1828
    %v1902 = vpop.xlane.xlu0 %1901
    %1903 = vadd.xlane.f32.xlu0 %v1829
    %v1904 = vpop.xlane.xlu0 %1903
    %1905 = vadd.xlane.f32.xlu0 %v1830
    %v1906 = vpop.xlane.xlu0 %1905
    %1907 = vadd.xlane.f32.xlu0 %v1831
    %v1908 = vpop.xlane.xlu0 %1907
    %1909 = vadd.xlane.f32.xlu0 %v1832
    %v1910 = vpop.xlane.xlu0 %1909
    %1911 = vadd.xlane.f32.xlu0 %v1833
    %v1912 = vpop.xlane.xlu0 %1911
    %1913 = vadd.xlane.f32.xlu0 %v1834
    %v1914 = vpop.xlane.xlu0 %1913
    %1915 = vadd.xlane.f32.xlu0 %v1835
    %v1916 = vpop.xlane.xlu0 %1915
    %v1917 = vmul.f32 %v1902, %v894
    %v1918 = vmul.f32 %v1904, %v894
    %v1919 = vmul.f32 %v1906, %v894
    %v1920 = vmul.f32 %v1908, %v894
    %v1921 = vmul.f32 %v1910, %v894
    %v1922 = vmul.f32 %v1912, %v894
    %v1923 = vmul.f32 %v1914, %v894
    %v1924 = vmul.f32 %v1916, %v894
    %v1925 = vsub.f32 %v1828, %v1917
    %v1926 = vsub.f32 %v1829, %v1918
    %v1927 = vsub.f32 %v1830, %v1919
    %v1928 = vsub.f32 %v1831, %v1920
    %v1929 = vsub.f32 %v1832, %v1921
    %v1930 = vsub.f32 %v1833, %v1922
    %v1931 = vsub.f32 %v1834, %v1923
    %v1932 = vsub.f32 %v1835, %v1924
    %v1933 = vmul.f32 %v1925, %v1925
    %v1934 = vmul.f32 %v1926, %v1926
    %v1935 = vmul.f32 %v1927, %v1927
    %v1936 = vmul.f32 %v1928, %v1928
    %v1937 = vmul.f32 %v1929, %v1929
    %v1938 = vmul.f32 %v1930, %v1930
    %v1939 = vmul.f32 %v1931, %v1931
    %v1940 = vmul.f32 %v1932, %v1932
    %1941 = vadd.xlane.f32.xlu0 %v1933
    %v1942 = vpop.xlane.xlu0 %1941
    %1943 = vadd.xlane.f32.xlu0 %v1934
    %v1944 = vpop.xlane.xlu0 %1943
    %1945 = vadd.xlane.f32.xlu0 %v1935
    %v1946 = vpop.xlane.xlu0 %1945
    %1947 = vadd.xlane.f32.xlu0 %v1936
    %v1948 = vpop.xlane.xlu0 %1947
    %1949 = vadd.xlane.f32.xlu0 %v1937
    %v1950 = vpop.xlane.xlu0 %1949
    %1951 = vadd.xlane.f32.xlu0 %v1938
    %v1952 = vpop.xlane.xlu0 %1951
    %1953 = vadd.xlane.f32.xlu0 %v1939
    %v1954 = vpop.xlane.xlu0 %1953
    %1955 = vadd.xlane.f32.xlu0 %v1940
    %v1956 = vpop.xlane.xlu0 %1955
    %v1957 = vmul.f32 %v1942, %v894
    %v1958 = vmul.f32 %v1944, %v894
    %v1959 = vmul.f32 %v1946, %v894
    %v1960 = vmul.f32 %v1948, %v894
    %v1961 = vmul.f32 %v1950, %v894
    %v1962 = vmul.f32 %v1952, %v894
    %v1963 = vmul.f32 %v1954, %v894
    %v1964 = vmul.f32 %v1956, %v894
    %v1965 = vadd.f32 %v1957, 1e-05
    %v1966 = vadd.f32 %v1958, 1e-05
    %v1967 = vadd.f32 %v1959, 1e-05
    %v1968 = vadd.f32 %v1960, 1e-05
    %v1969 = vadd.f32 %v1961, 1e-05
    %v1970 = vadd.f32 %v1962, 1e-05
    %v1971 = vadd.f32 %v1963, 1e-05
    %v1972 = vadd.f32 %v1964, 1e-05
    %v1973 = vrsqrt.pop %v1965
    %v1974 = vmul.f32 %v1973, %v1965
    %v1975 = vmul.f32 %v1974, %v1973
    %v1976 = vmul.f32 0.5, %v1975
    %v1977 = vsub.f32 1.5, %v1976
    %v1978 = vmul.f32 %v1973, %v1977
    %vm1979 = vweird.f32 %v1965
    %vm1980 = vweird.f32 %v1973
    %vm1981 = vmor %vm1979, %vm1980
    %v1982 = vsel %vm1981, %v1973, %v1978
    %v1983 = vrsqrt.pop %v1966
    %v1984 = vmul.f32 %v1983, %v1966
    %v1985 = vmul.f32 %v1984, %v1983
    %v1986 = vmul.f32 0.5, %v1985
    %v1987 = vsub.f32 1.5, %v1986
    %v1988 = vmul.f32 %v1983, %v1987
    %vm1989 = vweird.f32 %v1966
    %vm1990 = vweird.f32 %v1983
    %vm1991 = vmor %vm1989, %vm1990
    %v1992 = vsel %vm1991, %v1983, %v1988
    %v1993 = vrsqrt.pop %v1967
    %v1994 = vmul.f32 %v1993, %v1967
    %v1995 = vmul.f32 %v1994, %v1993
    %v1996 = vmul.f32 0.5, %v1995
    %v1997 = vsub.f32 1.5, %v1996
    %v1998 = vmul.f32 %v1993, %v1997
    %vm1999 = vweird.f32 %v1967
    %vm2000 = vweird.f32 %v1993
    %vm2001 = vmor %vm1999, %vm2000
    %v2002 = vsel %vm2001, %v1993, %v1998
    %v2003 = vrsqrt.pop %v1968
    %v2004 = vmul.f32 %v2003, %v1968
    %v2005 = vmul.f32 %v2004, %v2003
    %v2006 = vmul.f32 0.5, %v2005
    %v2007 = vsub.f32 1.5, %v2006
    %v2008 = vmul.f32 %v2003, %v2007
    %vm2009 = vweird.f32 %v1968
    %vm2010 = vweird.f32 %v2003
    %vm2011 = vmor %vm2009, %vm2010
    %v2012 = vsel %vm2011, %v2003, %v2008
    %v2013 = vrsqrt.pop %v1969
    %v2014 = vmul.f32 %v2013, %v1969
    %v2015 = vmul.f32 %v2014, %v2013
    %v2016 = vmul.f32 0.5, %v2015
    %v2017 = vsub.f32 1.5, %v2016
    %v2018 = vmul.f32 %v2013, %v2017
    %vm2019 = vweird.f32 %v1969
    %vm2020 = vweird.f32 %v2013
    %vm2021 = vmor %vm2019, %vm2020
    %v2022 = vsel %vm2021, %v2013, %v2018
    %v2023 = vrsqrt.pop %v1970
    %v2024 = vmul.f32 %v2023, %v1970
    %v2025 = vmul.f32 %v2024, %v2023
    %v2026 = vmul.f32 0.5, %v2025
    %v2027 = vsub.f32 1.5, %v2026
    %v2028 = vmul.f32 %v2023, %v2027
    %vm2029 = vweird.f32 %v1970
    %vm2030 = vweird.f32 %v2023
    %vm2031 = vmor %vm2029, %vm2030
    %v2032 = vsel %vm2031, %v2023, %v2028
    %v2033 = vrsqrt.pop %v1971
    %v2034 = vmul.f32 %v2033, %v1971
    %v2035 = vmul.f32 %v2034, %v2033
    %v2036 = vmul.f32 0.5, %v2035
    %v2037 = vsub.f32 1.5, %v2036
    %v2038 = vmul.f32 %v2033, %v2037
    %vm2039 = vweird.f32 %v1971
    %vm2040 = vweird.f32 %v2033
    %vm2041 = vmor %vm2039, %vm2040
    %v2042 = vsel %vm2041, %v2033, %v2038
    %v2043 = vrsqrt.pop %v1972
    %v2044 = vmul.f32 %v2043, %v1972
    %v2045 = vmul.f32 %v2044, %v2043
    %v2046 = vmul.f32 0.5, %v2045
    %v2047 = vsub.f32 1.5, %v2046
    %v2048 = vmul.f32 %v2043, %v2047
    %vm2049 = vweird.f32 %v1972
    %vm2050 = vweird.f32 %v2043
    %vm2051 = vmor %vm2049, %vm2050
    %v2052 = vsel %vm2051, %v2043, %v2048
    %v2053 = vmul.f32 %v1925, %v1982
    %v2054 = vmul.f32 %v1926, %v1992
    %v2055 = vmul.f32 %v1927, %v2002
    %v2056 = vmul.f32 %v1928, %v2012
    %v2057 = vmul.f32 %v1929, %v2022
    %v2058 = vmul.f32 %v1930, %v2032
    %v2059 = vmul.f32 %v1931, %v2042
    %v2060 = vmul.f32 %v1932, %v2052
    %v2062 = vperm.slane %v1836, 0
    %v2064 = vmul.f32 %v2053, %v2062
    %v2065 = vmul.f32 %v2054, %v2062
    %v2066 = vmul.f32 %v2055, %v2062
    %v2067 = vmul.f32 %v2056, %v2062
    %v2068 = vmul.f32 %v2057, %v2062
    %v2069 = vmul.f32 %v2058, %v2062
    %v2070 = vmul.f32 %v2059, %v2062
    %v2071 = vmul.f32 %v2060, %v2062
    %v2072 = vpack.c.bf16 %v2065, %v2064
    %v2073 = vpack.c.bf16 %v2067, %v2066
    %v2074 = vpack.c.bf16 %v2069, %v2068
    %v2075 = vpack.c.bf16 %v2071, %v2070
    %v2108 = vunpack.c.l.b16 %v1837
    %v2109 = vunpack.c.h.b16 %v1837
    %v2110 = vunpack.c.l.b16 %v1838
    %v2111 = vunpack.c.h.b16 %v1838
    %v2112 = vunpack.c.l.b16 %v1839
    %v2113 = vunpack.c.h.b16 %v1839
    %v2114 = vunpack.c.l.b16 %v1840
    %v2115 = vunpack.c.h.b16 %v1840
    %v2116 = vunpack.c.l.b16 %v1841
    %v2117 = vunpack.c.h.b16 %v1841
    %v2118 = vunpack.c.l.b16 %v1842
    %v2119 = vunpack.c.h.b16 %v1842
    %v2120 = vunpack.c.l.b16 %v1843
    %v2121 = vunpack.c.h.b16 %v1843
    %v2122 = vunpack.c.l.b16 %v1844
    %v2123 = vunpack.c.h.b16 %v1844
    %v2124 = vunpack.c.l.b16 %v1845
    %v2125 = vunpack.c.h.b16 %v1845
    %v2126 = vunpack.c.l.b16 %v1846
    %v2127 = vunpack.c.h.b16 %v1846
    %v2128 = vunpack.c.l.b16 %v1847
    %v2129 = vunpack.c.h.b16 %v1847
    %v2130 = vunpack.c.l.b16 %v1848
    %v2131 = vunpack.c.h.b16 %v1848
    %v2132 = vunpack.c.l.b16 %v1849
    %v2133 = vunpack.c.h.b16 %v1849
    %v2134 = vunpack.c.l.b16 %v1850
    %v2135 = vunpack.c.h.b16 %v1850
    %v2136 = vunpack.c.l.b16 %v1851
    %v2137 = vunpack.c.h.b16 %v1851
    %v2138 = vunpack.c.l.b16 %v1852
    %v2139 = vunpack.c.h.b16 %v1852
    %v2140 = vunpack.c.l.b16 %v1853
    %v2141 = vunpack.c.h.b16 %v1853
    %v2142 = vunpack.c.l.b16 %v1854
    %v2143 = vunpack.c.h.b16 %v1854
    %v2144 = vunpack.c.l.b16 %v1855
    %v2145 = vunpack.c.h.b16 %v1855
    %v2146 = vunpack.c.l.b16 %v1856
    %v2147 = vunpack.c.h.b16 %v1856
    %v2148 = vunpack.c.l.b16 %v1857
    %v2149 = vunpack.c.h.b16 %v1857
    %v2150 = vunpack.c.l.b16 %v1858
    %v2151 = vunpack.c.h.b16 %v1858
    %v2152 = vunpack.c.l.b16 %v1859
    %v2153 = vunpack.c.h.b16 %v1859
    %v2154 = vunpack.c.l.b16 %v1860
    %v2155 = vunpack.c.h.b16 %v1860
    %v2156 = vunpack.c.l.b16 %v1861
    %v2157 = vunpack.c.h.b16 %v1861
    %v2158 = vunpack.c.l.b16 %v1862
    %v2159 = vunpack.c.h.b16 %v1862
    %v2160 = vunpack.c.l.b16 %v1863
    %v2161 = vunpack.c.h.b16 %v1863
    %v2162 = vunpack.c.l.b16 %v1864
    %v2163 = vunpack.c.h.b16 %v1864
    %v2164 = vunpack.c.l.b16 %v1865
    %v2165 = vunpack.c.h.b16 %v1865
    %v2166 = vunpack.c.l.b16 %v1866
    %v2167 = vunpack.c.h.b16 %v1866
    %v2168 = vunpack.c.l.b16 %v1867
    %v2169 = vunpack.c.h.b16 %v1867
    %v2170 = vunpack.c.l.b16 %v1868
    %v2171 = vunpack.c.h.b16 %v1868
    %v2172 = vpack.c.b16 %v2112, %v2108
    %v2173 = vpack.c.b16 %v2113, %v2109
    %v2174 = vpack.c.b16 %v2114, %v2110
    %v2175 = vpack.c.b16 %v2115, %v2111
    %v2176 = vpack.c.b16 %v2120, %v2116
    %v2177 = vpack.c.b16 %v2121, %v2117
    %v2178 = vpack.c.b16 %v2122, %v2118
    %v2179 = vpack.c.b16 %v2123, %v2119
    %v2180 = vpack.c.b16 %v2128, %v2124
    %v2181 = vpack.c.b16 %v2129, %v2125
    %v2182 = vpack.c.b16 %v2130, %v2126
    %v2183 = vpack.c.b16 %v2131, %v2127
    %v2184 = vpack.c.b16 %v2136, %v2132
    %v2185 = vpack.c.b16 %v2137, %v2133
    %v2186 = vpack.c.b16 %v2138, %v2134
    %v2187 = vpack.c.b16 %v2139, %v2135
    %v2188 = vpack.c.b16 %v2144, %v2140
    %v2189 = vpack.c.b16 %v2145, %v2141
    %v2190 = vpack.c.b16 %v2146, %v2142
    %v2191 = vpack.c.b16 %v2147, %v2143
    %v2192 = vpack.c.b16 %v2152, %v2148
    %v2193 = vpack.c.b16 %v2153, %v2149
    %v2194 = vpack.c.b16 %v2154, %v2150
    %v2195 = vpack.c.b16 %v2155, %v2151
    %v2196 = vpack.c.b16 %v2160, %v2156
    %v2197 = vpack.c.b16 %v2161, %v2157
    %v2198 = vpack.c.b16 %v2162, %v2158
    %v2199 = vpack.c.b16 %v2163, %v2159
    %v2200 = vpack.c.b16 %v2168, %v2164
    %v2201 = vpack.c.b16 %v2169, %v2165
    %v2202 = vpack.c.b16 %v2170, %v2166
    %v2203 = vpack.c.b16 %v2171, %v2167
    %2236 = vmatpush.bf16.msra.mxu0 %v2200
    %2237 = vmatpush.bf16.msra.mxu0 %v2196
    %2238 = vmatpush.bf16.msra.mxu0 %v2192
    %2239 = vmatpush.bf16.msra.mxu0 %v2188
    %2240 = vmatpush.bf16.msra.mxu0 %v2184
    %2241 = vmatpush.bf16.msra.mxu0 %v2180
    %2242 = vmatpush.bf16.msra.mxu0 %v2176
    %2243 = vmatpush.bf16.msra.mxu0 %v2172
    %2244 = vmatmul.bf16.gmra.mxu0 %v2072
    %v2245 = vpop.f32.mrf.mxu0
    %v2246 = vadd.f32 0.0, %v2245
    %v2247 = vpop.f32.mrf.mxu0
    %v2248 = vadd.f32 0.0, %v2247
    %2249 = vmatmul.bf16.gmra.mxu0 %v2073
    %v2250 = vpop.f32.mrf.mxu0
    %v2251 = vadd.f32 0.0, %v2250
    %v2252 = vpop.f32.mrf.mxu0
    %v2253 = vadd.f32 0.0, %v2252
    %2254 = vmatmul.bf16.gmra.mxu0 %v2074
    %v2255 = vpop.f32.mrf.mxu0
    %v2256 = vadd.f32 0.0, %v2255
    %v2257 = vpop.f32.mrf.mxu0
    %v2258 = vadd.f32 0.0, %v2257
    %2259 = vmatmul.bf16.gmra.mxu0 %v2075
    %v2260 = vpop.f32.mrf.mxu0
    %v2261 = vadd.f32 0.0, %v2260
    %v2262 = vpop.f32.mrf.mxu0
    %v2263 = vadd.f32 0.0, %v2262
    %2264 = vdwg.mxu0
    %2265 = vmatpush.bf16.msra.mxu0 %v2201
    %2266 = vmatpush.bf16.msra.mxu0 %v2197
    %2267 = vmatpush.bf16.msra.mxu0 %v2193
    %2268 = vmatpush.bf16.msra.mxu0 %v2189
    %2269 = vmatpush.bf16.msra.mxu0 %v2185
    %2270 = vmatpush.bf16.msra.mxu0 %v2181
    %2271 = vmatpush.bf16.msra.mxu0 %v2177
    %2272 = vmatpush.bf16.msra.mxu0 %v2173
    %2273 = vmatmul.bf16.gmra.mxu0 %v2072
    %v2274 = vpop.f32.mrf.mxu0
    %v2275 = vadd.f32 0.0, %v2274
    %v2276 = vpop.f32.mrf.mxu0
    %v2277 = vadd.f32 0.0, %v2276
    %2278 = vmatmul.bf16.gmra.mxu0 %v2073
    %v2279 = vpop.f32.mrf.mxu0
    %v2280 = vadd.f32 0.0, %v2279
    %v2281 = vpop.f32.mrf.mxu0
    %v2282 = vadd.f32 0.0, %v2281
    %2283 = vmatmul.bf16.gmra.mxu0 %v2074
    %v2284 = vpop.f32.mrf.mxu0
    %v2285 = vadd.f32 0.0, %v2284
    %v2286 = vpop.f32.mrf.mxu0
    %v2287 = vadd.f32 0.0, %v2286
    %2288 = vmatmul.bf16.gmra.mxu0 %v2075
    %v2289 = vpop.f32.mrf.mxu0
    %v2290 = vadd.f32 0.0, %v2289
    %v2291 = vpop.f32.mrf.mxu0
    %v2292 = vadd.f32 0.0, %v2291
    %2293 = vdwg.mxu0
    %2294 = vmatpush.bf16.msra.mxu0 %v2202
    %2295 = vmatpush.bf16.msra.mxu0 %v2198
    %2296 = vmatpush.bf16.msra.mxu0 %v2194
    %2297 = vmatpush.bf16.msra.mxu0 %v2190
    %2298 = vmatpush.bf16.msra.mxu0 %v2186
    %2299 = vmatpush.bf16.msra.mxu0 %v2182
    %2300 = vmatpush.bf16.msra.mxu0 %v2178
    %2301 = vmatpush.bf16.msra.mxu0 %v2174
    %2302 = vmatmul.bf16.gmra.mxu0 %v2072
    %v2303 = vpop.f32.mrf.mxu0
    %v2304 = vadd.f32 0.0, %v2303
    %v2305 = vpop.f32.mrf.mxu0
    %v2306 = vadd.f32 0.0, %v2305
    %2307 = vmatmul.bf16.gmra.mxu0 %v2073
    %v2308 = vpop.f32.mrf.mxu0
    %v2309 = vadd.f32 0.0, %v2308
    %v2310 = vpop.f32.mrf.mxu0
    %v2311 = vadd.f32 0.0, %v2310
    %2312 = vmatmul.bf16.gmra.mxu0 %v2074
    %v2313 = vpop.f32.mrf.mxu0
    %v2314 = vadd.f32 0.0, %v2313
    %v2315 = vpop.f32.mrf.mxu0
    %v2316 = vadd.f32 0.0, %v2315
    %2317 = vmatmul.bf16.gmra.mxu0 %v2075
    %v2318 = vpop.f32.mrf.mxu0
    %v2319 = vadd.f32 0.0, %v2318
    %v2320 = vpop.f32.mrf.mxu0
    %v2321 = vadd.f32 0.0, %v2320
    %2322 = vdwg.mxu0
    %2323 = vmatpush.bf16.msra.mxu0 %v2203
    %2324 = vmatpush.bf16.msra.mxu0 %v2199
    %2325 = vmatpush.bf16.msra.mxu0 %v2195
    %2326 = vmatpush.bf16.msra.mxu0 %v2191
    %2327 = vmatpush.bf16.msra.mxu0 %v2187
    %2328 = vmatpush.bf16.msra.mxu0 %v2183
    %2329 = vmatpush.bf16.msra.mxu0 %v2179
    %2330 = vmatpush.bf16.msra.mxu0 %v2175
    %2331 = vmatmul.bf16.gmra.mxu0 %v2072
    %v2332 = vpop.f32.mrf.mxu0
    %v2333 = vadd.f32 0.0, %v2332
    %v2334 = vpop.f32.mrf.mxu0
    %v2335 = vadd.f32 0.0, %v2334
    %2336 = vmatmul.bf16.gmra.mxu0 %v2073
    %v2337 = vpop.f32.mrf.mxu0
    %v2338 = vadd.f32 0.0, %v2337
    %v2339 = vpop.f32.mrf.mxu0
    %v2340 = vadd.f32 0.0, %v2339
    %2341 = vmatmul.bf16.gmra.mxu0 %v2074
    %v2342 = vpop.f32.mrf.mxu0
    %v2343 = vadd.f32 0.0, %v2342
    %v2344 = vpop.f32.mrf.mxu0
    %v2345 = vadd.f32 0.0, %v2344
    %2346 = vmatmul.bf16.gmra.mxu0 %v2075
    %v2347 = vpop.f32.mrf.mxu0
    %v2348 = vadd.f32 0.0, %v2347
    %v2349 = vpop.f32.mrf.mxu0
    %v2350 = vadd.f32 0.0, %v2349
    %2351 = vdwg.mxu0
    %v2352 = vxor.u32 %v2246, 2147483648
    %v2353 = vxor.u32 %v2275, 2147483648
    %v2354 = vxor.u32 %v2248, 2147483648
    %v2355 = vxor.u32 %v2277, 2147483648
    %v2356 = vxor.u32 %v2251, 2147483648
    %v2357 = vxor.u32 %v2280, 2147483648
    %v2358 = vxor.u32 %v2253, 2147483648
    %v2359 = vxor.u32 %v2282, 2147483648
    %v2360 = vxor.u32 %v2256, 2147483648
    %v2361 = vxor.u32 %v2285, 2147483648
    %v2362 = vxor.u32 %v2258, 2147483648
    %v2363 = vxor.u32 %v2287, 2147483648
    %v2364 = vxor.u32 %v2261, 2147483648
    %v2365 = vxor.u32 %v2290, 2147483648
    %v2366 = vxor.u32 %v2263, 2147483648
    %v2367 = vxor.u32 %v2292, 2147483648
    %v2368 = vmul.f32 %v2352, 1.442695
    %v2369 = vpow.pop %v2368
    %v2370 = vmul.f32 %v2353, 1.442695
    %v2371 = vpow.pop %v2370
    %v2372 = vmul.f32 %v2354, 1.442695
    %v2373 = vpow.pop %v2372
    %v2374 = vmul.f32 %v2355, 1.442695
    %v2375 = vpow.pop %v2374
    %v2376 = vmul.f32 %v2356, 1.442695
    %v2377 = vpow.pop %v2376
    %v2378 = vmul.f32 %v2357, 1.442695
    %v2379 = vpow.pop %v2378
    %v2380 = vmul.f32 %v2358, 1.442695
    %v2381 = vpow.pop %v2380
    %v2382 = vmul.f32 %v2359, 1.442695
    %v2383 = vpow.pop %v2382
    %v2384 = vmul.f32 %v2360, 1.442695
    %v2385 = vpow.pop %v2384
    %v2386 = vmul.f32 %v2361, 1.442695
    %v2387 = vpow.pop %v2386
    %v2388 = vmul.f32 %v2362, 1.442695
    %v2389 = vpow.pop %v2388
    %v2390 = vmul.f32 %v2363, 1.442695
    %v2391 = vpow.pop %v2390
    %v2392 = vmul.f32 %v2364, 1.442695
    %v2393 = vpow.pop %v2392
    %v2394 = vmul.f32 %v2365, 1.442695
    %v2395 = vpow.pop %v2394
    %v2396 = vmul.f32 %v2366, 1.442695
    %v2397 = vpow.pop %v2396
    %v2398 = vmul.f32 %v2367, 1.442695
    %v2399 = vpow.pop %v2398
    %v2400 = vadd.f32 %v2369, 1.0
    %v2401 = vadd.f32 %v2371, 1.0
    %v2402 = vadd.f32 %v2373, 1.0
    %v2403 = vadd.f32 %v2375, 1.0
    %v2404 = vadd.f32 %v2377, 1.0
    %v2405 = vadd.f32 %v2379, 1.0
    %v2406 = vadd.f32 %v2381, 1.0
    %v2407 = vadd.f32 %v2383, 1.0
    %v2408 = vadd.f32 %v2385, 1.0
    %v2409 = vadd.f32 %v2387, 1.0
    %v2410 = vadd.f32 %v2389, 1.0
    %v2411 = vadd.f32 %v2391, 1.0
    %v2412 = vadd.f32 %v2393, 1.0
    %v2413 = vadd.f32 %v2395, 1.0
    %v2414 = vadd.f32 %v2397, 1.0
    %v2415 = vadd.f32 %v2399, 1.0
    %v2416 = vrcp.pop %v2400
    %v2417 = vmul.f32 %v2400, %v2416
    %v2418 = vsub.f32 1.0, %v2417
    %v2419 = vmul.f32 %v2416, %v2418
    %v2420 = vadd.f32 %v2416, %v2419
    %vm2421 = vweird.f32 %v2400
    %vm2422 = vweird.f32 %v2416
    %vm2423 = vmor %vm2421, %vm2422
    %v2424 = vsel %vm2423, %v2416, %v2420
    %v2425 = vand.u32 2147483647, %v2400
    %vm2426 = vcmp.eq.f32.partialorder %v2425, 8.507059e+37
    %v2427 = vand.u32 %v2400, 2147483648
    %v2428 = vor.u32 1.1754944e-38, %v2427
    %v2429 = vsel %vm2426, %v2428, %v2424
    %v2430 = vmul.f32 1.0, %v2429
    %v2431 = vrcp.pop %v2401
    %v2432 = vmul.f32 %v2401, %v2431
    %v2433 = vsub.f32 1.0, %v2432
    %v2434 = vmul.f32 %v2431, %v2433
    %v2435 = vadd.f32 %v2431, %v2434
    %vm2436 = vweird.f32 %v2401
    %vm2437 = vweird.f32 %v2431
    %vm2438 = vmor %vm2436, %vm2437
    %v2439 = vsel %vm2438, %v2431, %v2435
    %v2440 = vand.u32 2147483647, %v2401
    %vm2441 = vcmp.eq.f32.partialorder %v2440, 8.507059e+37
    %v2442 = vand.u32 %v2401, 2147483648
    %v2443 = vor.u32 1.1754944e-38, %v2442
    %v2444 = vsel %vm2441, %v2443, %v2439
    %v2445 = vmul.f32 1.0, %v2444
    %v2446 = vrcp.pop %v2402
    %v2447 = vmul.f32 %v2402, %v2446
    %v2448 = vsub.f32 1.0, %v2447
    %v2449 = vmul.f32 %v2446, %v2448
    %v2450 = vadd.f32 %v2446, %v2449
    %vm2451 = vweird.f32 %v2402
    %vm2452 = vweird.f32 %v2446
    %vm2453 = vmor %vm2451, %vm2452
    %v2454 = vsel %vm2453, %v2446, %v2450
    %v2455 = vand.u32 2147483647, %v2402
    %vm2456 = vcmp.eq.f32.partialorder %v2455, 8.507059e+37
    %v2457 = vand.u32 %v2402, 2147483648
    %v2458 = vor.u32 1.1754944e-38, %v2457
    %v2459 = vsel %vm2456, %v2458, %v2454
    %v2460 = vmul.f32 1.0, %v2459
    %v2461 = vrcp.pop %v2403
    %v2462 = vmul.f32 %v2403, %v2461
    %v2463 = vsub.f32 1.0, %v2462
    %v2464 = vmul.f32 %v2461, %v2463
    %v2465 = vadd.f32 %v2461, %v2464
    %vm2466 = vweird.f32 %v2403
    %vm2467 = vweird.f32 %v2461
    %vm2468 = vmor %vm2466, %vm2467
    %v2469 = vsel %vm2468, %v2461, %v2465
    %v2470 = vand.u32 2147483647, %v2403
    %vm2471 = vcmp.eq.f32.partialorder %v2470, 8.507059e+37
    %v2472 = vand.u32 %v2403, 2147483648
    %v2473 = vor.u32 1.1754944e-38, %v2472
    %v2474 = vsel %vm2471, %v2473, %v2469
    %v2475 = vmul.f32 1.0, %v2474
    %v2476 = vrcp.pop %v2404
    %v2477 = vmul.f32 %v2404, %v2476
    %v2478 = vsub.f32 1.0, %v2477
    %v2479 = vmul.f32 %v2476, %v2478
    %v2480 = vadd.f32 %v2476, %v2479
    %vm2481 = vweird.f32 %v2404
    %vm2482 = vweird.f32 %v2476
    %vm2483 = vmor %vm2481, %vm2482
    %v2484 = vsel %vm2483, %v2476, %v2480
    %v2485 = vand.u32 2147483647, %v2404
    %vm2486 = vcmp.eq.f32.partialorder %v2485, 8.507059e+37
    %v2487 = vand.u32 %v2404, 2147483648
    %v2488 = vor.u32 1.1754944e-38, %v2487
    %v2489 = vsel %vm2486, %v2488, %v2484
    %v2490 = vmul.f32 1.0, %v2489
    %v2491 = vrcp.pop %v2405
    %v2492 = vmul.f32 %v2405, %v2491
    %v2493 = vsub.f32 1.0, %v2492
    %v2494 = vmul.f32 %v2491, %v2493
    %v2495 = vadd.f32 %v2491, %v2494
    %vm2496 = vweird.f32 %v2405
    %vm2497 = vweird.f32 %v2491
    %vm2498 = vmor %vm2496, %vm2497
    %v2499 = vsel %vm2498, %v2491, %v2495
    %v2500 = vand.u32 2147483647, %v2405
    %vm2501 = vcmp.eq.f32.partialorder %v2500, 8.507059e+37
    %v2502 = vand.u32 %v2405, 2147483648
    %v2503 = vor.u32 1.1754944e-38, %v2502
    %v2504 = vsel %vm2501, %v2503, %v2499
    %v2505 = vmul.f32 1.0, %v2504
    %v2506 = vrcp.pop %v2406
    %v2507 = vmul.f32 %v2406, %v2506
    %v2508 = vsub.f32 1.0, %v2507
    %v2509 = vmul.f32 %v2506, %v2508
    %v2510 = vadd.f32 %v2506, %v2509
    %vm2511 = vweird.f32 %v2406
    %vm2512 = vweird.f32 %v2506
    %vm2513 = vmor %vm2511, %vm2512
    %v2514 = vsel %vm2513, %v2506, %v2510
    %v2515 = vand.u32 2147483647, %v2406
    %vm2516 = vcmp.eq.f32.partialorder %v2515, 8.507059e+37
    %v2517 = vand.u32 %v2406, 2147483648
    %v2518 = vor.u32 1.1754944e-38, %v2517
    %v2519 = vsel %vm2516, %v2518, %v2514
    %v2520 = vmul.f32 1.0, %v2519
    %v2521 = vrcp.pop %v2407
    %v2522 = vmul.f32 %v2407, %v2521
    %v2523 = vsub.f32 1.0, %v2522
    %v2524 = vmul.f32 %v2521, %v2523
    %v2525 = vadd.f32 %v2521, %v2524
    %vm2526 = vweird.f32 %v2407
    %vm2527 = vweird.f32 %v2521
    %vm2528 = vmor %vm2526, %vm2527
    %v2529 = vsel %vm2528, %v2521, %v2525
    %v2530 = vand.u32 2147483647, %v2407
    %vm2531 = vcmp.eq.f32.partialorder %v2530, 8.507059e+37
    %v2532 = vand.u32 %v2407, 2147483648
    %v2533 = vor.u32 1.1754944e-38, %v2532
    %v2534 = vsel %vm2531, %v2533, %v2529
    %v2535 = vmul.f32 1.0, %v2534
    %v2536 = vrcp.pop %v2408
    %v2537 = vmul.f32 %v2408, %v2536
    %v2538 = vsub.f32 1.0, %v2537
    %v2539 = vmul.f32 %v2536, %v2538
    %v2540 = vadd.f32 %v2536, %v2539
    %vm2541 = vweird.f32 %v2408
    %vm2542 = vweird.f32 %v2536
    %vm2543 = vmor %vm2541, %vm2542
    %v2544 = vsel %vm2543, %v2536, %v2540
    %v2545 = vand.u32 2147483647, %v2408
    %vm2546 = vcmp.eq.f32.partialorder %v2545, 8.507059e+37
    %v2547 = vand.u32 %v2408, 2147483648
    %v2548 = vor.u32 1.1754944e-38, %v2547
    %v2549 = vsel %vm2546, %v2548, %v2544
    %v2550 = vmul.f32 1.0, %v2549
    %v2551 = vrcp.pop %v2409
    %v2552 = vmul.f32 %v2409, %v2551
    %v2553 = vsub.f32 1.0, %v2552
    %v2554 = vmul.f32 %v2551, %v2553
    %v2555 = vadd.f32 %v2551, %v2554
    %vm2556 = vweird.f32 %v2409
    %vm2557 = vweird.f32 %v2551
    %vm2558 = vmor %vm2556, %vm2557
    %v2559 = vsel %vm2558, %v2551, %v2555
    %v2560 = vand.u32 2147483647, %v2409
    %vm2561 = vcmp.eq.f32.partialorder %v2560, 8.507059e+37
    %v2562 = vand.u32 %v2409, 2147483648
    %v2563 = vor.u32 1.1754944e-38, %v2562
    %v2564 = vsel %vm2561, %v2563, %v2559
    %v2565 = vmul.f32 1.0, %v2564
    %v2566 = vrcp.pop %v2410
    %v2567 = vmul.f32 %v2410, %v2566
    %v2568 = vsub.f32 1.0, %v2567
    %v2569 = vmul.f32 %v2566, %v2568
    %v2570 = vadd.f32 %v2566, %v2569
    %vm2571 = vweird.f32 %v2410
    %vm2572 = vweird.f32 %v2566
    %vm2573 = vmor %vm2571, %vm2572
    %v2574 = vsel %vm2573, %v2566, %v2570
    %v2575 = vand.u32 2147483647, %v2410
    %vm2576 = vcmp.eq.f32.partialorder %v2575, 8.507059e+37
    %v2577 = vand.u32 %v2410, 2147483648
    %v2578 = vor.u32 1.1754944e-38, %v2577
    %v2579 = vsel %vm2576, %v2578, %v2574
    %v2580 = vmul.f32 1.0, %v2579
    %v2581 = vrcp.pop %v2411
    %v2582 = vmul.f32 %v2411, %v2581
    %v2583 = vsub.f32 1.0, %v2582
    %v2584 = vmul.f32 %v2581, %v2583
    %v2585 = vadd.f32 %v2581, %v2584
    %vm2586 = vweird.f32 %v2411
    %vm2587 = vweird.f32 %v2581
    %vm2588 = vmor %vm2586, %vm2587
    %v2589 = vsel %vm2588, %v2581, %v2585
    %v2590 = vand.u32 2147483647, %v2411
    %vm2591 = vcmp.eq.f32.partialorder %v2590, 8.507059e+37
    %v2592 = vand.u32 %v2411, 2147483648
    %v2593 = vor.u32 1.1754944e-38, %v2592
    %v2594 = vsel %vm2591, %v2593, %v2589
    %v2595 = vmul.f32 1.0, %v2594
    %v2596 = vrcp.pop %v2412
    %v2597 = vmul.f32 %v2412, %v2596
    %v2598 = vsub.f32 1.0, %v2597
    %v2599 = vmul.f32 %v2596, %v2598
    %v2600 = vadd.f32 %v2596, %v2599
    %vm2601 = vweird.f32 %v2412
    %vm2602 = vweird.f32 %v2596
    %vm2603 = vmor %vm2601, %vm2602
    %v2604 = vsel %vm2603, %v2596, %v2600
    %v2605 = vand.u32 2147483647, %v2412
    %vm2606 = vcmp.eq.f32.partialorder %v2605, 8.507059e+37
    %v2607 = vand.u32 %v2412, 2147483648
    %v2608 = vor.u32 1.1754944e-38, %v2607
    %v2609 = vsel %vm2606, %v2608, %v2604
    %v2610 = vmul.f32 1.0, %v2609
    %v2611 = vrcp.pop %v2413
    %v2612 = vmul.f32 %v2413, %v2611
    %v2613 = vsub.f32 1.0, %v2612
    %v2614 = vmul.f32 %v2611, %v2613
    %v2615 = vadd.f32 %v2611, %v2614
    %vm2616 = vweird.f32 %v2413
    %vm2617 = vweird.f32 %v2611
    %vm2618 = vmor %vm2616, %vm2617
    %v2619 = vsel %vm2618, %v2611, %v2615
    %v2620 = vand.u32 2147483647, %v2413
    %vm2621 = vcmp.eq.f32.partialorder %v2620, 8.507059e+37
    %v2622 = vand.u32 %v2413, 2147483648
    %v2623 = vor.u32 1.1754944e-38, %v2622
    %v2624 = vsel %vm2621, %v2623, %v2619
    %v2625 = vmul.f32 1.0, %v2624
    %v2626 = vrcp.pop %v2414
    %v2627 = vmul.f32 %v2414, %v2626
    %v2628 = vsub.f32 1.0, %v2627
    %v2629 = vmul.f32 %v2626, %v2628
    %v2630 = vadd.f32 %v2626, %v2629
    %vm2631 = vweird.f32 %v2414
    %vm2632 = vweird.f32 %v2626
    %vm2633 = vmor %vm2631, %vm2632
    %v2634 = vsel %vm2633, %v2626, %v2630
    %v2635 = vand.u32 2147483647, %v2414
    %vm2636 = vcmp.eq.f32.partialorder %v2635, 8.507059e+37
    %v2637 = vand.u32 %v2414, 2147483648
    %v2638 = vor.u32 1.1754944e-38, %v2637
    %v2639 = vsel %vm2636, %v2638, %v2634
    %v2640 = vmul.f32 1.0, %v2639
    %v2641 = vrcp.pop %v2415
    %v2642 = vmul.f32 %v2415, %v2641
    %v2643 = vsub.f32 1.0, %v2642
    %v2644 = vmul.f32 %v2641, %v2643
    %v2645 = vadd.f32 %v2641, %v2644
    %vm2646 = vweird.f32 %v2415
    %vm2647 = vweird.f32 %v2641
    %vm2648 = vmor %vm2646, %vm2647
    %v2649 = vsel %vm2648, %v2641, %v2645
    %v2650 = vand.u32 2147483647, %v2415
    %vm2651 = vcmp.eq.f32.partialorder %v2650, 8.507059e+37
    %v2652 = vand.u32 %v2415, 2147483648
    %v2653 = vor.u32 1.1754944e-38, %v2652
    %v2654 = vsel %vm2651, %v2653, %v2649
    %v2655 = vmul.f32 1.0, %v2654
    %v2656 = vmul.f32 %v2246, %v2430
    %v2657 = vmul.f32 %v2275, %v2445
    %v2658 = vmul.f32 %v2248, %v2460
    %v2659 = vmul.f32 %v2277, %v2475
    %v2660 = vmul.f32 %v2251, %v2490
    %v2661 = vmul.f32 %v2280, %v2505
    %v2662 = vmul.f32 %v2253, %v2520
    %v2663 = vmul.f32 %v2282, %v2535
    %v2664 = vmul.f32 %v2256, %v2550
    %v2665 = vmul.f32 %v2285, %v2565
    %v2666 = vmul.f32 %v2258, %v2580
    %v2667 = vmul.f32 %v2287, %v2595
    %v2668 = vmul.f32 %v2261, %v2610
    %v2669 = vmul.f32 %v2290, %v2625
    %v2670 = vmul.f32 %v2263, %v2640
    %v2671 = vmul.f32 %v2292, %v2655
    %v2672 = vmul.f32 %v2656, %v2304
    %v2673 = vmul.f32 %v2657, %v2333
    %v2674 = vmul.f32 %v2658, %v2306
    %v2675 = vmul.f32 %v2659, %v2335
    %v2676 = vmul.f32 %v2660, %v2309
    %v2677 = vmul.f32 %v2661, %v2338
    %v2678 = vmul.f32 %v2662, %v2311
    %v2679 = vmul.f32 %v2663, %v2340
    %v2680 = vmul.f32 %v2664, %v2314
    %v2681 = vmul.f32 %v2665, %v2343
    %v2682 = vmul.f32 %v2666, %v2316
    %v2683 = vmul.f32 %v2667, %v2345
    %v2684 = vmul.f32 %v2668, %v2319
    %v2685 = vmul.f32 %v2669, %v2348
    %v2686 = vmul.f32 %v2670, %v2321
    %v2687 = vmul.f32 %v2671, %v2350
    %v2688 = vpack.c.bf16 %v2674, %v2672
    %v2689 = vpack.c.bf16 %v2675, %v2673
    %v2690 = vpack.c.bf16 %v2678, %v2676
    %v2691 = vpack.c.bf16 %v2679, %v2677
    %v2692 = vpack.c.bf16 %v2682, %v2680
    %v2693 = vpack.c.bf16 %v2683, %v2681
    %v2694 = vpack.c.bf16 %v2686, %v2684
    %v2695 = vpack.c.bf16 %v2687, %v2685
    %v2728 = vunpack.c.l.b16 %v1869
    %v2729 = vunpack.c.l.b16 %v1870
    %v2730 = vunpack.c.l.b16 %v1871
    %v2731 = vunpack.c.l.b16 %v1872
    %v2732 = vunpack.c.l.b16 %v1873
    %v2733 = vunpack.c.l.b16 %v1874
    %v2734 = vunpack.c.l.b16 %v1875
    %v2735 = vunpack.c.l.b16 %v1876
    %v2736 = vunpack.c.l.b16 %v1877
    %v2737 = vunpack.c.l.b16 %v1878
    %v2738 = vunpack.c.l.b16 %v1879
    %v2739 = vunpack.c.l.b16 %v1880
    %v2740 = vunpack.c.l.b16 %v1881
    %v2741 = vunpack.c.l.b16 %v1882
    %v2742 = vunpack.c.l.b16 %v1883
    %v2743 = vunpack.c.l.b16 %v1884
    %v2744 = vunpack.c.l.b16 %v1885
    %v2745 = vunpack.c.l.b16 %v1886
    %v2746 = vunpack.c.l.b16 %v1887
    %v2747 = vunpack.c.l.b16 %v1888
    %v2748 = vunpack.c.l.b16 %v1889
    %v2749 = vunpack.c.l.b16 %v1890
    %v2750 = vunpack.c.l.b16 %v1891
    %v2751 = vunpack.c.l.b16 %v1892
    %v2752 = vunpack.c.l.b16 %v1893
    %v2753 = vunpack.c.l.b16 %v1894
    %v2754 = vunpack.c.l.b16 %v1895
    %v2755 = vunpack.c.l.b16 %v1896
    %v2756 = vunpack.c.l.b16 %v1897
    %v2757 = vunpack.c.l.b16 %v1898
    %v2758 = vunpack.c.l.b16 %v1899
    %v2759 = vunpack.c.l.b16 %v1900
    %v2760 = vpack.c.b16 %v2729, %v2728
    %v2761 = vpack.c.b16 %v2731, %v2730
    %v2762 = vpack.c.b16 %v2733, %v2732
    %v2763 = vpack.c.b16 %v2735, %v2734
    %v2764 = vpack.c.b16 %v2737, %v2736
    %v2765 = vpack.c.b16 %v2739, %v2738
    %v2766 = vpack.c.b16 %v2741, %v2740
    %v2767 = vpack.c.b16 %v2743, %v2742
    %v2768 = vpack.c.b16 %v2745, %v2744
    %v2769 = vpack.c.b16 %v2747, %v2746
    %v2770 = vpack.c.b16 %v2749, %v2748
    %v2771 = vpack.c.b16 %v2751, %v2750
    %v2772 = vpack.c.b16 %v2753, %v2752
    %v2773 = vpack.c.b16 %v2755, %v2754
    %v2774 = vpack.c.b16 %v2757, %v2756
    %v2775 = vpack.c.b16 %v2759, %v2758
    %2792 = vmatpush.bf16.msra.mxu0 %v2767
    %2793 = vmatpush.bf16.msra.mxu0 %v2766
    %2794 = vmatpush.bf16.msra.mxu0 %v2765
    %2795 = vmatpush.bf16.msra.mxu0 %v2764
    %2796 = vmatpush.bf16.msra.mxu0 %v2763
    %2797 = vmatpush.bf16.msra.mxu0 %v2762
    %2798 = vmatpush.bf16.msra.mxu0 %v2761
    %2799 = vmatpush.bf16.msra.mxu0 %v2760
    %2800 = vmatmul.bf16.gmra.mxu0 %v2688
    %v2801 = vpop.f32.mrf.mxu0
    %v2802 = vadd.f32 0.0, %v2801
    %v2803 = vpop.f32.mrf.mxu0
    %v2804 = vadd.f32 0.0, %v2803
    %2805 = vmatmul.bf16.gmra.mxu0 %v2690
    %v2806 = vpop.f32.mrf.mxu0
    %v2807 = vadd.f32 0.0, %v2806
    %v2808 = vpop.f32.mrf.mxu0
    %v2809 = vadd.f32 0.0, %v2808
    %2810 = vmatmul.bf16.gmra.mxu0 %v2692
    %v2811 = vpop.f32.mrf.mxu0
    %v2812 = vadd.f32 0.0, %v2811
    %v2813 = vpop.f32.mrf.mxu0
    %v2814 = vadd.f32 0.0, %v2813
    %2815 = vmatmul.bf16.gmra.mxu0 %v2694
    %v2816 = vpop.f32.mrf.mxu0
    %v2817 = vadd.f32 0.0, %v2816
    %v2818 = vpop.f32.mrf.mxu0
    %v2819 = vadd.f32 0.0, %v2818
    %2820 = vdwg.mxu0
    %2821 = vmatpush.bf16.msra.mxu0 %v2775
    %2822 = vmatpush.bf16.msra.mxu0 %v2774
    %2823 = vmatpush.bf16.msra.mxu0 %v2773
    %2824 = vmatpush.bf16.msra.mxu0 %v2772
    %2825 = vmatpush.bf16.msra.mxu0 %v2771
    %2826 = vmatpush.bf16.msra.mxu0 %v2770
    %2827 = vmatpush.bf16.msra.mxu0 %v2769
    %2828 = vmatpush.bf16.msra.mxu0 %v2768
    %2829 = vmatmul.bf16.gmra.mxu0 %v2689
    %v2830 = vpop.f32.mrf.mxu0
    %v2831 = vadd.f32 %v2802, %v2830
    %v2832 = vpop.f32.mrf.mxu0
    %v2833 = vadd.f32 %v2804, %v2832
    %2834 = vmatmul.bf16.gmra.mxu0 %v2691
    %v2835 = vpop.f32.mrf.mxu0
    %v2836 = vadd.f32 %v2807, %v2835
    %v2837 = vpop.f32.mrf.mxu0
    %v2838 = vadd.f32 %v2809, %v2837
    %2839 = vmatmul.bf16.gmra.mxu0 %v2693
    %v2840 = vpop.f32.mrf.mxu0
    %v2841 = vadd.f32 %v2812, %v2840
    %v2842 = vpop.f32.mrf.mxu0
    %v2843 = vadd.f32 %v2814, %v2842
    %2844 = vmatmul.bf16.gmra.mxu0 %v2695
    %v2845 = vpop.f32.mrf.mxu0
    %v2846 = vadd.f32 %v2817, %v2845
    %v2847 = vpop.f32.mrf.mxu0
    %v2848 = vadd.f32 %v2819, %v2847
    %2849 = vdwg.mxu0
    %v2850 = vadd.f32 %v1828, %v2831
    %v2851 = vadd.f32 %v1829, %v2833
    %v2852 = vadd.f32 %v1830, %v2836
    %v2853 = vadd.f32 %v1831, %v2838
    %v2854 = vadd.f32 %v1832, %v2841
    %v2855 = vadd.f32 %v1833, %v2843
    %v2856 = vadd.f32 %v1834, %v2846
    %v2857 = vadd.f32 %v1835, %v2848
    %2858 = vst [vmem:[#allocation16] sm:$0xff] %v2850
    %2859 = vst [vmem:[#allocation16 + $0x8] sm:$0xff] %v2851
    %2860 = vst [vmem:[#allocation16 + $0x10] sm:$0xff] %v2852
    %2861 = vst [vmem:[#allocation16 + $0x18] sm:$0xff] %v2853
    %2862 = vst [vmem:[#allocation16 + $0x20] sm:$0xff] %v2854
    %2863 = vst [vmem:[#allocation16 + $0x28] sm:$0xff] %v2855
    %2864 = vst [vmem:[#allocation16 + $0x30] sm:$0xff] %v2856
    %2865 = vst [vmem:[#allocation16 + $0x38] sm:$0xff] %v2857
    // Predicated region
    $region74: #{tpu_custom_call.1} parent=1 // pred_check
      _
    $region75: #{tpu_custom_call.1} parent=1 // pred_check_branch
      %2867 = sbr.rel (0) target = $region77
    $region76: #{tpu_custom_call.1} parent=1 // pred_region
      %2869 = vsyncadd [#allocation4], 0
      %s2870 = sshll.u32 [#allocation16], 4
      %s2871 = int_to_ptr.vmem [resolvable:$true] %s2870
      %s2872 = sshll.u32 %s10, 4
      %s2873 = int_to_ptr.hbm [resolvable:$true] %s2872
      %2878 = dma.vmem_to_hbm [thread:$0]  %s2871, 1024, %s2873, [#allocation4], 128, 128, 8
    $region77: #{tpu_custom_call.1} parent=1 // pred_fallthru
      _
    // Predicated region
    $region78: #{tpu_custom_call.1} parent=1 // pred_check
      _
    $region79: #{tpu_custom_call.1} parent=1 // pred_check_branch
      %2880 = sbr.rel (0) target = $region81
    $region80: #{tpu_custom_call.1} parent=1 // pred_region
      %2882 = dma.done [#allocation4], 1024
    $region81: #{tpu_custom_call.1} parent=1 // pred_fallthru
      _
    %2883 = vsyncpa [#allocation3], 1
    %2884 = vsyncpa [#allocation6], 1
    %2885 = vsyncpa [#allocation9], 1
    %2886 = vsyncpa [#allocation12], 1
    %2887 = vsyncpa [#allocation15], 1
    %2888 = vsyncpa [#allocation4], 1

</llo_original>
